<compile_context>
chip_gen: v7x
topology: tpu7x:2x2x1
jax: 0.10.0
libtpu: 0.0.40
codegen_flags: <defaults>
</compile_context>

<pallas_src>
import math
import functools

import jax
import jax.numpy as jnp
from jax.experimental import pallas as pl
from jax.experimental.pallas import tpu as pltpu


def _round_up(x, m):
    return ((x + m - 1) // m) * m


def _pad_last(x, target):
    pad = target - x.shape[-1]
    if pad == 0:
        return x
    return jnp.pad(x, [(0, 0)] * (x.ndim - 1) + [(0, pad)])


def _pad2(x, rows, cols):
    pr, pc = rows - x.shape[0], cols - x.shape[1]
    if pr == 0 and pc == 0:
        return x
    return jnp.pad(x, ((0, pr), (0, pc)))


def _pick_block_b(B, Nq, rows_target=1024):
    """Largest divisor of B with block_b*Nq <= rows_target, keeping >=2 grid steps."""
    divisors = [bt for bt in range(1, B + 1) if B % bt == 0]
    best = 1
    for bt in divisors:
        if bt * Nq <= rows_target:
            best = bt
    # v7x has 2 TensorCores; a length-1 grid would leave one idle.
    if best == B and B > 1:
        best = max(bt for bt in divisors if bt <= B // 2)
    return best


def _mab_kernel(q_ref, k_ref,
                wq_ref, bq_ref,
                wkv_ref, bkv_ref,
                wo_ref, bo_ref,
                o_ref,
                *, dim_V, dim_V_pad, num_heads, scale):
    Bt, Nq, dQ = q_ref.shape
    _, Nk, dK = k_ref.shape
    ds = dim_V // num_heads
    cdt = wq_ref.dtype          # MXU operand dtype (bf16 fast path / f32 exact path)

    # ---- Projections: fold the batch tile into the matmul M dimension. ----
    Qx = q_ref[...].reshape(Bt * Nq, dQ).astype(cdt)
    Kx = k_ref[...].reshape(Bt * Nk, dK).astype(cdt)

    Qp = jnp.dot(Qx, wq_ref[...], preferred_element_type=jnp.float32) + bq_ref[...]
    KVp = jnp.dot(Kx, wkv_ref[...], preferred_element_type=jnp.float32) + bkv_ref[...]

    Qp = Qp.reshape(Bt, Nq, dim_V_pad)
    Kp = KVp[:, :dim_V_pad].reshape(Bt, Nk, dim_V_pad)   # 128-aligned (lane-dense) split
    Vp = KVp[:, dim_V_pad:].reshape(Bt, Nk, dim_V_pad)

    # ---- Per-head attention via column masking (no lane-sparse slices). ----
    col = jax.lax.broadcasted_iota(jnp.int32, (1, 1, dim_V_pad), 2)
    Qs = (Qp * scale).astype(cdt)          # 1/sqrt(dim_V) folded into the Q operand
    acc = jnp.zeros((Bt, Nq, dim_V_pad), jnp.float32)
    for h in range(num_heads):
        m = (col >= h * ds) & (col < (h + 1) * ds)
        kh = jnp.where(m, Kp, 0.0).astype(cdt)
        vh = jnp.where(m, Vp, 0.0).astype(cdt)
        # Masked full-width contraction == head-h contraction (other cols are 0).
        s = jnp.einsum('bqc,bkc->bqk', Qs, kh, preferred_element_type=jnp.float32)
        s = s - jnp.max(s, axis=-1, keepdims=True)
        e = jnp.exp(s)
        a = e / jnp.sum(e, axis=-1, keepdims=True)       # exact softmax
        # Masked V -> contribution lands only in head-h columns of acc.
        acc = acc + jnp.einsum('bqk,bkc->bqc', a.astype(cdt), vh,
                               preferred_element_type=jnp.float32)

    # ---- Residual + fc_o + relu residual; single lane-dense store. ----
    O = (Qp + acc).reshape(Bt * Nq, dim_V_pad)
    Oo = jnp.dot(O.astype(cdt), wo_ref[...], preferred_element_type=jnp.float32) + bo_ref[...]
    O = O + jnp.maximum(Oo, 0.0)
    o_ref[...] = O.reshape(Bt, Nq, dim_V_pad).astype(o_ref.dtype)


def mab_forward(Q, K, params, *, dim_V, num_heads,
                compute_dtype=jnp.bfloat16):
    """Q: [B, Nq, dim_Q], K: [B, Nk, dim_K] -> [B, Nq, dim_V]."""
    assert dim_V % num_heads == 0, "dim_V must be divisible by num_heads"
    B, Nq, dim_Q = Q.shape
    _, Nk, dim_K = K.shape

    # Lane-dense padded feature dims (multiples of 128).
    dim_Q_pad = _round_up(dim_Q, 128)
    dim_K_pad = _round_up(dim_K, 128)
    dim_V_pad = _round_up(dim_V, 128)

    Q_in = _pad_last(Q, dim_Q_pad)
    K_in = _pad_last(K, dim_K_pad)

    # Weights: zero-pad rows (contraction) and cols (output), pre-cast the
    # matmul operands to compute_dtype; biases stay f32 (added post-dot).
    wq = _pad2(params["wq"], dim_Q_pad, dim_V_pad).astype(compute_dtype)
    bq = _pad_last(params["bq"], dim_V_pad).astype(jnp.float32)
    wk = _pad2(params["wk"], dim_K_pad, dim_V_pad)
    wv = _pad2(params["wv"], dim_K_pad, dim_V_pad)
    wkv = jnp.concatenate([wk, wv], axis=1).astype(compute_dtype)      # (dim_K_pad, 2*Dp)
    bkv = jnp.concatenate([_pad_last(params["bk"], dim_V_pad),
                           _pad_last(params["bv"], dim_V_pad)], axis=1).astype(jnp.float32)
    wo = _pad2(params["wo"], dim_V_pad, dim_V_pad).astype(compute_dtype)
    bo = _pad_last(params["bo"], dim_V_pad).astype(jnp.float32)

    block_b = _pick_block_b(B, Nq)

    # Per-step VMEM bill (double-buffered tiles + weights + live intermediates),
    # clamped to 64 MiB so the same config fits v7x.
    bytes_of = lambda a: a.size * a.dtype.itemsize
    tile_bytes = 4 * block_b * (Nq * dim_Q_pad + Nk * dim_K_pad + Nq * dim_V_pad)
    weight_bytes = sum(bytes_of(a) for a in (wq, bq, wkv, bkv, wo, bo))
    inter_bytes = 4 * block_b * (4 * Nq * dim_V_pad + 2 * Nk * dim_V_pad + Nq * Nk)
    vmem_limit = int(min(max(2 * (4 * tile_bytes + 2 * weight_bytes + inter_bytes),
                             32 << 20), 64 << 20))

    kernel = functools.partial(_mab_kernel, dim_V=dim_V, dim_V_pad=dim_V_pad,
                               num_heads=num_heads, scale=1.0 / math.sqrt(dim_V))

    # Weights/biases: constant index maps -> Pallas does not re-DMA them per step.
    full = lambda a: pl.BlockSpec(a.shape, lambda b: (0,) * a.ndim)

    out = pl.pallas_call(
        kernel,
        out_shape=jax.ShapeDtypeStruct((B, Nq, dim_V_pad), Q.dtype),
        grid_spec=pltpu.PrefetchScalarGridSpec(
            num_scalar_prefetch=0,
            grid=(B // block_b,),
            in_specs=[
                pl.BlockSpec((block_b, Nq, dim_Q_pad), lambda b: (b, 0, 0)),
                pl.BlockSpec((block_b, Nk, dim_K_pad), lambda b: (b, 0, 0)),
                full(wq), full(bq), full(wkv), full(bkv), full(wo), full(bo),
            ],
            out_specs=pl.BlockSpec((block_b, Nq, dim_V_pad), lambda b: (b, 0, 0)),
        ),
        compiler_params=pltpu.CompilerParams(
            dimension_semantics=("parallel",),
            vmem_limit_bytes=vmem_limit,
        ),
    )(Q_in, K_in, wq, bq, wkv, bkv, wo, bo)

    # Strip the lane padding (no-op when dim_V is already 128-aligned).
    return out[:, :, :dim_V]


def mab_reference(Q, K, params, *, dim_V, num_heads):
    """Plain-JAX reference mirroring the PyTorch forward (mask=None, ln=False)."""
    wq, bq, wk, bk, wv, bv, wo, bo = (
        params["wq"], params["bq"], params["wk"], params["bk"],
        params["wv"], params["bv"], params["wo"], params["bo"],
    )
    Qp = Q @ wq + bq
    Kp = K @ wk + bk
    Vp = K @ wv + bv
    ds = dim_V // num_heads
    B = Q.shape[0]
    # torch: cat(split(dim=2), dim=0) -> head-major stacking along batch
    Q_ = jnp.concatenate([Qp[:, :, h * ds:(h + 1) * ds] for h in range(num_heads)], axis=0)
    K_ = jnp.concatenate([Kp[:, :, h * ds:(h + 1) * ds] for h in range(num_heads)], axis=0)
    V_ = jnp.concatenate([Vp[:, :, h * ds:(h + 1) * ds] for h in range(num_heads)], axis=0)
    before = jnp.einsum("bqd,bkd->bqk", Q_, K_) / math.sqrt(dim_V)
    A = jax.nn.softmax(before, axis=2)
    Oh = Q_ + jnp.einsum("bqk,bkd->bqd", A, V_)
    O = jnp.concatenate([Oh[h * B:(h + 1) * B] for h in range(num_heads)], axis=2)
    O = O + jax.nn.relu(O @ wo + bo)
    return O


def init_params(key, dim_Q, dim_K, dim_V):
    """Deterministic nn.Linear-style init: U(-1/sqrt(fan_in), 1/sqrt(fan_in))."""
    keys = jax.random.split(key, 8)

    def lin(kw, kb, fan_in, fan_out):
        bound = 1.0 / math.sqrt(fan_in)
        w = jax.random.uniform(kw, (fan_in, fan_out), jnp.float32, -bound, bound)
        b = jax.random.uniform(kb, (1, fan_out), jnp.float32, -bound, bound)
        return w, b

    wq, bq = lin(keys[0], keys[1], dim_Q, dim_V)
    wk, bk = lin(keys[2], keys[3], dim_K, dim_V)
    wv, bv = lin(keys[4], keys[5], dim_K, dim_V)
    wo, bo = lin(keys[6], keys[7], dim_V, dim_V)
    return dict(wq=wq, bq=bq, wk=wk, bk=bk, wv=wv, bv=bv, wo=wo, bo=bo)


if __name__ == "__main__":
    # Small shapes consistent with MAB(dim_Q, dim_K, dim_V, num_heads)
    B, Nq, Nk = 2, 8, 8
    dim_Q, dim_K, dim_V, num_heads = 16, 16, 32, 4

    key = jax.random.PRNGKey(0)
    kq, kk, kp = jax.random.split(key, 3)
    Q = jax.random.normal(kq, (B, Nq, dim_Q), jnp.float32)
    K = jax.random.normal(kk, (B, Nk, dim_K), jnp.float32)
    params = init_params(kp, dim_Q, dim_K, dim_V)

    ref = mab_reference(Q, K, params, dim_V=dim_V, num_heads=num_heads)

    # Exact path (f32 MXU operands) — tight correctness check.
    out_f32 = jax.block_until_ready(
        mab_forward(Q, K, params, dim_V=dim_V, num_heads=num_heads,
                    compute_dtype=jnp.float32))
    assert out_f32.shape == (B, Nq, dim_V)
    assert jnp.allclose(out_f32, ref, rtol=2e-3, atol=2e-3), "f32 mismatch vs reference"

    # Fast path (bf16 MXU operands, f32 accumulation) — relaxed tolerance.
    out_bf16 = jax.block_until_ready(
        mab_forward(Q, K, params, dim_V=dim_V, num_heads=num_heads,
                    compute_dtype=jnp.bfloat16))
    assert out_bf16.shape == (B, Nq, dim_V)
    assert jnp.allclose(out_bf16, ref, rtol=5e-2, atol=5e-2), "bf16 mismatch vs reference"

    print("KERNEL_OK")
</pallas_src>

<mosaic_0001>
module attributes {stable_mosaic.version = 11 : i64} {
  func.func @_mab_kernel(%arg0: i32, %arg1: memref<1x8x128xf32, #tpu.memory_space<vmem>>, %arg2: memref<1x8x128xf32, #tpu.memory_space<vmem>>, %arg3: memref<128x128xf32, #tpu.memory_space<vmem>>, %arg4: memref<1x128xf32, #tpu.memory_space<vmem>>, %arg5: memref<128x256xf32, #tpu.memory_space<vmem>>, %arg6: memref<1x256xf32, #tpu.memory_space<vmem>>, %arg7: memref<128x128xf32, #tpu.memory_space<vmem>>, %arg8: memref<1x128xf32, #tpu.memory_space<vmem>>, %arg9: memref<1x8x128xf32, #tpu.memory_space<vmem>>) attributes {dimension_semantics = [#tpu.dimension_semantics<parallel>], iteration_bounds = array<i64: 2>, scalar_prefetch = 0 : i64, scratch_operands = 0 : i64, tpu.core_type = #tpu.core_type<tc>, window_params = [{transform_indices = @transform_0, window_bounds = array<i64: 1, 8, 128>}, {transform_indices = @transform_1, window_bounds = array<i64: 1, 8, 128>}, {pipeline_mode = #tpu.pipeline_mode<synchronous>, transform_indices = @transform_2, window_bounds = array<i64: 128, 128>}, {pipeline_mode = #tpu.pipeline_mode<synchronous>, transform_indices = @transform_3, window_bounds = array<i64: 1, 128>}, {pipeline_mode = #tpu.pipeline_mode<synchronous>, transform_indices = @transform_4, window_bounds = array<i64: 128, 256>}, {pipeline_mode = #tpu.pipeline_mode<synchronous>, transform_indices = @transform_5, window_bounds = array<i64: 1, 256>}, {pipeline_mode = #tpu.pipeline_mode<synchronous>, transform_indices = @transform_6, window_bounds = array<i64: 128, 128>}, {pipeline_mode = #tpu.pipeline_mode<synchronous>, transform_indices = @transform_7, window_bounds = array<i64: 1, 128>}, {transform_indices = @transform_8, window_bounds = array<i64: 1, 8, 128>}]} {
    %c0 = arith.constant 0 : index
    %c0_0 = arith.constant 0 : index
    %c0_1 = arith.constant 0 : index
    %0 = vector.load %arg1[%c0, %c0_0, %c0_1] : memref<1x8x128xf32, #tpu.memory_space<vmem>>, vector<1x8x128xf32>
    %1 = vector.shape_cast %0 : vector<1x8x128xf32> to vector<8x128xf32>
    %c0_2 = arith.constant 0 : index
    %c0_3 = arith.constant 0 : index
    %c0_4 = arith.constant 0 : index
    %2 = vector.load %arg2[%c0_2, %c0_3, %c0_4] : memref<1x8x128xf32, #tpu.memory_space<vmem>>, vector<1x8x128xf32>
    %3 = vector.shape_cast %2 : vector<1x8x128xf32> to vector<8x128xf32>
    %c0_5 = arith.constant 0 : index
    %c0_6 = arith.constant 0 : index
    %4 = vector.load %arg3[%c0_5, %c0_6] : memref<128x128xf32, #tpu.memory_space<vmem>>, vector<128x128xf32>
    %cst = arith.constant dense<0.000000e+00> : vector<8x128xf32>
    %5 = tpu.matmul %1, %4, %cst {dimension_numbers = #tpu.dot_dimension_numbers<[1], [0], [0], [1], [0, 0, 1, 1], [], []>} : vector<8x128xf32>, vector<128x128xf32>, vector<8x128xf32> -> vector<8x128xf32>
    %c0_7 = arith.constant 0 : index
    %c0_8 = arith.constant 0 : index
    %6 = vector.load %arg4[%c0_7, %c0_8] : memref<1x128xf32, #tpu.memory_space<vmem>>, vector<1x128xf32>
    %7 = vector.broadcast %6 : vector<1x128xf32> to vector<8x128xf32>
    %8 = arith.addf %5, %7 : vector<8x128xf32>
    %c0_9 = arith.constant 0 : index
    %c0_10 = arith.constant 0 : index
    %9 = vector.load %arg5[%c0_9, %c0_10] : memref<128x256xf32, #tpu.memory_space<vmem>>, vector<128x256xf32>
    %cst_11 = arith.constant dense<0.000000e+00> : vector<8x256xf32>
    %10 = tpu.matmul %3, %9, %cst_11 {dimension_numbers = #tpu.dot_dimension_numbers<[1], [0], [0], [1], [0, 0, 1, 1], [], []>} : vector<8x128xf32>, vector<128x256xf32>, vector<8x256xf32> -> vector<8x256xf32>
    %c0_12 = arith.constant 0 : index
    %c0_13 = arith.constant 0 : index
    %11 = vector.load %arg6[%c0_12, %c0_13] : memref<1x256xf32, #tpu.memory_space<vmem>>, vector<1x256xf32>
    %12 = vector.broadcast %11 : vector<1x256xf32> to vector<8x256xf32>
    %13 = arith.addf %10, %12 : vector<8x256xf32>
    %14 = vector.shape_cast %8 : vector<8x128xf32> to vector<1x8x128xf32>
    %15 = vector.extract_strided_slice %13 {offsets = [0, 0], sizes = [8, 128], strides = [1, 1]} : vector<8x256xf32> to vector<8x128xf32>
    %16 = vector.shape_cast %15 : vector<8x128xf32> to vector<1x8x128xf32>
    %17 = vector.extract_strided_slice %13 {offsets = [0, 128], sizes = [8, 128], strides = [1, 1]} : vector<8x256xf32> to vector<8x128xf32>
    %18 = vector.shape_cast %17 : vector<8x128xf32> to vector<1x8x128xf32>
    %19 = tpu.iota {dimensions = array<i32: 2>} : vector<1x1x128xi32>
    %cst_14 = arith.constant 0.176776692 : f32
    %20 = vector.broadcast %cst_14 : f32 to vector<1x8x128xf32>
    %21 = arith.mulf %14, %20 : vector<1x8x128xf32>
    %cst_15 = arith.constant 0.000000e+00 : f32
    %22 = vector.broadcast %cst_15 : f32 to vector<1x8x128xf32>
    %c0_i32 = arith.constant 0 : i32
    %23 = vector.broadcast %c0_i32 : i32 to vector<1x1x128xi32>
    %24 = arith.cmpi sge, %19, %23 : vector<1x1x128xi32>
    %c8_i32 = arith.constant 8 : i32
    %25 = vector.broadcast %c8_i32 : i32 to vector<1x1x128xi32>
    %26 = arith.cmpi slt, %19, %25 : vector<1x1x128xi32>
    %27 = arith.andi %24, %26 : vector<1x1x128xi1>
    %cst_16 = arith.constant 0.000000e+00 : f32
    %28 = vector.shape_cast %27 : vector<1x1x128xi1> to vector<1x1x128xi1>
    %29 = vector.broadcast %28 : vector<1x1x128xi1> to vector<1x8x128xi1>
    %30 = vector.broadcast %cst_16 : f32 to vector<1x8x128xf32>
    %31 = arith.select %29, %16, %30 : vector<1x8x128xi1>, vector<1x8x128xf32>
    %cst_17 = arith.constant 0.000000e+00 : f32
    %32 = vector.shape_cast %27 : vector<1x1x128xi1> to vector<1x1x128xi1>
    %33 = vector.broadcast %32 : vector<1x1x128xi1> to vector<1x8x128xi1>
    %34 = vector.broadcast %cst_17 : f32 to vector<1x8x128xf32>
    %35 = arith.select %33, %18, %34 : vector<1x8x128xi1>, vector<1x8x128xf32>
    "tpu.trace_start"() <{level = 10 : i32, message = "bqc,bkc->bqk"}> : () -> ()
    %cst_18 = arith.constant dense<0.000000e+00> : vector<1x8x8xf32>
    %36 = tpu.matmul %21, %31, %cst_18 {dimension_numbers = #tpu.dot_dimension_numbers<[2], [2], [1], [1], [0, 0, 0, 1, 1, 1], [0], [0]>} : vector<1x8x128xf32>, vector<1x8x128xf32>, vector<1x8x8xf32> -> vector<1x8x8xf32>
    "tpu.trace_stop"() : () -> ()
    %cst_19 = arith.constant dense<0xFF800000> : vector<1x8xf32>
    %37 = vector.multi_reduction <maximumf>, %36, %cst_19 [2] : vector<1x8x8xf32> to vector<1x8xf32>
    %38 = vector.shape_cast %37 : vector<1x8xf32> to vector<1x8x1xf32>
    %39 = vector.broadcast %38 : vector<1x8x1xf32> to vector<1x8x8xf32>
    %40 = arith.subf %36, %39 : vector<1x8x8xf32>
    %41 = math.exp %40 : vector<1x8x8xf32>
    %cst_20 = arith.constant dense<0.000000e+00> : vector<1x8xf32>
    %42 = vector.multi_reduction <add>, %41, %cst_20 [2] : vector<1x8x8xf32> to vector<1x8xf32>
    %43 = vector.shape_cast %42 : vector<1x8xf32> to vector<1x8x1xf32>
    %44 = vector.broadcast %43 : vector<1x8x1xf32> to vector<1x8x8xf32>
    %45 = arith.divf %41, %44 : vector<1x8x8xf32>
    "tpu.trace_start"() <{level = 10 : i32, message = "bqk,bkc->bqc"}> : () -> ()
    %cst_21 = arith.constant dense<0.000000e+00> : vector<1x8x128xf32>
    %46 = tpu.matmul %45, %35, %cst_21 {dimension_numbers = #tpu.dot_dimension_numbers<[2], [1], [1], [2], [0, 0, 0, 1, 1, 2], [0], [0]>} : vector<1x8x8xf32>, vector<1x8x128xf32>, vector<1x8x128xf32> -> vector<1x8x128xf32>
    "tpu.trace_stop"() : () -> ()
    %47 = arith.addf %22, %46 : vector<1x8x128xf32>
    %c8_i32_22 = arith.constant 8 : i32
    %48 = vector.broadcast %c8_i32_22 : i32 to vector<1x1x128xi32>
    %49 = arith.cmpi sge, %19, %48 : vector<1x1x128xi32>
    %c16_i32 = arith.constant 16 : i32
    %50 = vector.broadcast %c16_i32 : i32 to vector<1x1x128xi32>
    %51 = arith.cmpi slt, %19, %50 : vector<1x1x128xi32>
    %52 = arith.andi %49, %51 : vector<1x1x128xi1>
    %cst_23 = arith.constant 0.000000e+00 : f32
    %53 = vector.shape_cast %52 : vector<1x1x128xi1> to vector<1x1x128xi1>
    %54 = vector.broadcast %53 : vector<1x1x128xi1> to vector<1x8x128xi1>
    %55 = vector.broadcast %cst_23 : f32 to vector<1x8x128xf32>
    %56 = arith.select %54, %16, %55 : vector<1x8x128xi1>, vector<1x8x128xf32>
    %cst_24 = arith.constant 0.000000e+00 : f32
    %57 = vector.shape_cast %52 : vector<1x1x128xi1> to vector<1x1x128xi1>
    %58 = vector.broadcast %57 : vector<1x1x128xi1> to vector<1x8x128xi1>
    %59 = vector.broadcast %cst_24 : f32 to vector<1x8x128xf32>
    %60 = arith.select %58, %18, %59 : vector<1x8x128xi1>, vector<1x8x128xf32>
    "tpu.trace_start"() <{level = 10 : i32, message = "bqc,bkc->bqk"}> : () -> ()
    %cst_25 = arith.constant dense<0.000000e+00> : vector<1x8x8xf32>
    %61 = tpu.matmul %21, %56, %cst_25 {dimension_numbers = #tpu.dot_dimension_numbers<[2], [2], [1], [1], [0, 0, 0, 1, 1, 1], [0], [0]>} : vector<1x8x128xf32>, vector<1x8x128xf32>, vector<1x8x8xf32> -> vector<1x8x8xf32>
    "tpu.trace_stop"() : () -> ()
    %cst_26 = arith.constant dense<0xFF800000> : vector<1x8xf32>
    %62 = vector.multi_reduction <maximumf>, %61, %cst_26 [2] : vector<1x8x8xf32> to vector<1x8xf32>
    %63 = vector.shape_cast %62 : vector<1x8xf32> to vector<1x8x1xf32>
    %64 = vector.broadcast %63 : vector<1x8x1xf32> to vector<1x8x8xf32>
    %65 = arith.subf %61, %64 : vector<1x8x8xf32>
    %66 = math.exp %65 : vector<1x8x8xf32>
    %cst_27 = arith.constant dense<0.000000e+00> : vector<1x8xf32>
    %67 = vector.multi_reduction <add>, %66, %cst_27 [2] : vector<1x8x8xf32> to vector<1x8xf32>
    %68 = vector.shape_cast %67 : vector<1x8xf32> to vector<1x8x1xf32>
    %69 = vector.broadcast %68 : vector<1x8x1xf32> to vector<1x8x8xf32>
    %70 = arith.divf %66, %69 : vector<1x8x8xf32>
    "tpu.trace_start"() <{level = 10 : i32, message = "bqk,bkc->bqc"}> : () -> ()
    %cst_28 = arith.constant dense<0.000000e+00> : vector<1x8x128xf32>
    %71 = tpu.matmul %70, %60, %cst_28 {dimension_numbers = #tpu.dot_dimension_numbers<[2], [1], [1], [2], [0, 0, 0, 1, 1, 2], [0], [0]>} : vector<1x8x8xf32>, vector<1x8x128xf32>, vector<1x8x128xf32> -> vector<1x8x128xf32>
    "tpu.trace_stop"() : () -> ()
    %72 = arith.addf %47, %71 : vector<1x8x128xf32>
    %c16_i32_29 = arith.constant 16 : i32
    %73 = vector.broadcast %c16_i32_29 : i32 to vector<1x1x128xi32>
    %74 = arith.cmpi sge, %19, %73 : vector<1x1x128xi32>
    %c24_i32 = arith.constant 24 : i32
    %75 = vector.broadcast %c24_i32 : i32 to vector<1x1x128xi32>
    %76 = arith.cmpi slt, %19, %75 : vector<1x1x128xi32>
    %77 = arith.andi %74, %76 : vector<1x1x128xi1>
    %cst_30 = arith.constant 0.000000e+00 : f32
    %78 = vector.shape_cast %77 : vector<1x1x128xi1> to vector<1x1x128xi1>
    %79 = vector.broadcast %78 : vector<1x1x128xi1> to vector<1x8x128xi1>
    %80 = vector.broadcast %cst_30 : f32 to vector<1x8x128xf32>
    %81 = arith.select %79, %16, %80 : vector<1x8x128xi1>, vector<1x8x128xf32>
    %cst_31 = arith.constant 0.000000e+00 : f32
    %82 = vector.shape_cast %77 : vector<1x1x128xi1> to vector<1x1x128xi1>
    %83 = vector.broadcast %82 : vector<1x1x128xi1> to vector<1x8x128xi1>
    %84 = vector.broadcast %cst_31 : f32 to vector<1x8x128xf32>
    %85 = arith.select %83, %18, %84 : vector<1x8x128xi1>, vector<1x8x128xf32>
    "tpu.trace_start"() <{level = 10 : i32, message = "bqc,bkc->bqk"}> : () -> ()
    %cst_32 = arith.constant dense<0.000000e+00> : vector<1x8x8xf32>
    %86 = tpu.matmul %21, %81, %cst_32 {dimension_numbers = #tpu.dot_dimension_numbers<[2], [2], [1], [1], [0, 0, 0, 1, 1, 1], [0], [0]>} : vector<1x8x128xf32>, vector<1x8x128xf32>, vector<1x8x8xf32> -> vector<1x8x8xf32>
    "tpu.trace_stop"() : () -> ()
    %cst_33 = arith.constant dense<0xFF800000> : vector<1x8xf32>
    %87 = vector.multi_reduction <maximumf>, %86, %cst_33 [2] : vector<1x8x8xf32> to vector<1x8xf32>
    %88 = vector.shape_cast %87 : vector<1x8xf32> to vector<1x8x1xf32>
    %89 = vector.broadcast %88 : vector<1x8x1xf32> to vector<1x8x8xf32>
    %90 = arith.subf %86, %89 : vector<1x8x8xf32>
    %91 = math.exp %90 : vector<1x8x8xf32>
    %cst_34 = arith.constant dense<0.000000e+00> : vector<1x8xf32>
    %92 = vector.multi_reduction <add>, %91, %cst_34 [2] : vector<1x8x8xf32> to vector<1x8xf32>
    %93 = vector.shape_cast %92 : vector<1x8xf32> to vector<1x8x1xf32>
    %94 = vector.broadcast %93 : vector<1x8x1xf32> to vector<1x8x8xf32>
    %95 = arith.divf %91, %94 : vector<1x8x8xf32>
    "tpu.trace_start"() <{level = 10 : i32, message = "bqk,bkc->bqc"}> : () -> ()
    %cst_35 = arith.constant dense<0.000000e+00> : vector<1x8x128xf32>
    %96 = tpu.matmul %95, %85, %cst_35 {dimension_numbers = #tpu.dot_dimension_numbers<[2], [1], [1], [2], [0, 0, 0, 1, 1, 2], [0], [0]>} : vector<1x8x8xf32>, vector<1x8x128xf32>, vector<1x8x128xf32> -> vector<1x8x128xf32>
    "tpu.trace_stop"() : () -> ()
    %97 = arith.addf %72, %96 : vector<1x8x128xf32>
    %c24_i32_36 = arith.constant 24 : i32
    %98 = vector.broadcast %c24_i32_36 : i32 to vector<1x1x128xi32>
    %99 = arith.cmpi sge, %19, %98 : vector<1x1x128xi32>
    %c32_i32 = arith.constant 32 : i32
    %100 = vector.broadcast %c32_i32 : i32 to vector<1x1x128xi32>
    %101 = arith.cmpi slt, %19, %100 : vector<1x1x128xi32>
    %102 = arith.andi %99, %101 : vector<1x1x128xi1>
    %cst_37 = arith.constant 0.000000e+00 : f32
    %103 = vector.shape_cast %102 : vector<1x1x128xi1> to vector<1x1x128xi1>
    %104 = vector.broadcast %103 : vector<1x1x128xi1> to vector<1x8x128xi1>
    %105 = vector.broadcast %cst_37 : f32 to vector<1x8x128xf32>
    %106 = arith.select %104, %16, %105 : vector<1x8x128xi1>, vector<1x8x128xf32>
    %cst_38 = arith.constant 0.000000e+00 : f32
    %107 = vector.shape_cast %102 : vector<1x1x128xi1> to vector<1x1x128xi1>
    %108 = vector.broadcast %107 : vector<1x1x128xi1> to vector<1x8x128xi1>
    %109 = vector.broadcast %cst_38 : f32 to vector<1x8x128xf32>
    %110 = arith.select %108, %18, %109 : vector<1x8x128xi1>, vector<1x8x128xf32>
    "tpu.trace_start"() <{level = 10 : i32, message = "bqc,bkc->bqk"}> : () -> ()
    %cst_39 = arith.constant dense<0.000000e+00> : vector<1x8x8xf32>
    %111 = tpu.matmul %21, %106, %cst_39 {dimension_numbers = #tpu.dot_dimension_numbers<[2], [2], [1], [1], [0, 0, 0, 1, 1, 1], [0], [0]>} : vector<1x8x128xf32>, vector<1x8x128xf32>, vector<1x8x8xf32> -> vector<1x8x8xf32>
    "tpu.trace_stop"() : () -> ()
    %cst_40 = arith.constant dense<0xFF800000> : vector<1x8xf32>
    %112 = vector.multi_reduction <maximumf>, %111, %cst_40 [2] : vector<1x8x8xf32> to vector<1x8xf32>
    %113 = vector.shape_cast %112 : vector<1x8xf32> to vector<1x8x1xf32>
    %114 = vector.broadcast %113 : vector<1x8x1xf32> to vector<1x8x8xf32>
    %115 = arith.subf %111, %114 : vector<1x8x8xf32>
    %116 = math.exp %115 : vector<1x8x8xf32>
    %cst_41 = arith.constant dense<0.000000e+00> : vector<1x8xf32>
    %117 = vector.multi_reduction <add>, %116, %cst_41 [2] : vector<1x8x8xf32> to vector<1x8xf32>
    %118 = vector.shape_cast %117 : vector<1x8xf32> to vector<1x8x1xf32>
    %119 = vector.broadcast %118 : vector<1x8x1xf32> to vector<1x8x8xf32>
    %120 = arith.divf %116, %119 : vector<1x8x8xf32>
    "tpu.trace_start"() <{level = 10 : i32, message = "bqk,bkc->bqc"}> : () -> ()
    %cst_42 = arith.constant dense<0.000000e+00> : vector<1x8x128xf32>
    %121 = tpu.matmul %120, %110, %cst_42 {dimension_numbers = #tpu.dot_dimension_numbers<[2], [1], [1], [2], [0, 0, 0, 1, 1, 2], [0], [0]>} : vector<1x8x8xf32>, vector<1x8x128xf32>, vector<1x8x128xf32> -> vector<1x8x128xf32>
    "tpu.trace_stop"() : () -> ()
    %122 = arith.addf %97, %121 : vector<1x8x128xf32>
    %123 = arith.addf %14, %122 : vector<1x8x128xf32>
    %124 = vector.shape_cast %123 : vector<1x8x128xf32> to vector<8x128xf32>
    %c0_43 = arith.constant 0 : index
    %c0_44 = arith.constant 0 : index
    %125 = vector.load %arg7[%c0_43, %c0_44] : memref<128x128xf32, #tpu.memory_space<vmem>>, vector<128x128xf32>
    %cst_45 = arith.constant dense<0.000000e+00> : vector<8x128xf32>
    %126 = tpu.matmul %124, %125, %cst_45 {dimension_numbers = #tpu.dot_dimension_numbers<[1], [0], [0], [1], [0, 0, 1, 1], [], []>} : vector<8x128xf32>, vector<128x128xf32>, vector<8x128xf32> -> vector<8x128xf32>
    %c0_46 = arith.constant 0 : index
    %c0_47 = arith.constant 0 : index
    %127 = vector.load %arg8[%c0_46, %c0_47] : memref<1x128xf32, #tpu.memory_space<vmem>>, vector<1x128xf32>
    %128 = vector.broadcast %127 : vector<1x128xf32> to vector<8x128xf32>
    %129 = arith.addf %126, %128 : vector<8x128xf32>
    %cst_48 = arith.constant 0.000000e+00 : f32
    %130 = vector.broadcast %cst_48 : f32 to vector<8x128xf32>
    %131 = arith.maximumf %129, %130 : vector<8x128xf32>
    %132 = arith.addf %124, %131 : vector<8x128xf32>
    %133 = vector.shape_cast %132 : vector<8x128xf32> to vector<1x8x128xf32>
    %c0_49 = arith.constant 0 : index
    %c0_50 = arith.constant 0 : index
    %c0_51 = arith.constant 0 : index
    %134 = vector.load %arg9[%c0_49, %c0_50, %c0_51] : memref<1x8x128xf32, #tpu.memory_space<vmem>>, vector<1x8x128xf32>
    tpu.vector_store %arg9[%c0_49, %c0_50, %c0_51], %133 {strides = array<i32>} : memref<1x8x128xf32, #tpu.memory_space<vmem>>, vector<1x8x128xf32>,
    return
  }
  func.func @transform_0(%arg0: i32) -> (i32, i32, i32) {
    %c0_i32 = arith.constant 0 : i32
    %c0_i32_0 = arith.constant 0 : i32
    %c0_i32_1 = arith.constant 0 : i32
    return %arg0, %c0_i32, %c0_i32_0 : i32, i32, i32
  }
  func.func @transform_1(%arg0: i32) -> (i32, i32, i32) {
    %c0_i32 = arith.constant 0 : i32
    %c0_i32_0 = arith.constant 0 : i32
    %c0_i32_1 = arith.constant 0 : i32
    return %arg0, %c0_i32, %c0_i32_0 : i32, i32, i32
  }
  func.func @transform_2(%arg0: i32) -> (i32, i32) {
    %c0_i32 = arith.constant 0 : i32
    %c0_i32_0 = arith.constant 0 : i32
    %c0_i32_1 = arith.constant 0 : i32
    return %c0_i32, %c0_i32_0 : i32, i32
  }
  func.func @transform_3(%arg0: i32) -> (i32, i32) {
    %c0_i32 = arith.constant 0 : i32
    %c0_i32_0 = arith.constant 0 : i32
    %c0_i32_1 = arith.constant 0 : i32
    return %c0_i32, %c0_i32_0 : i32, i32
  }
  func.func @transform_4(%arg0: i32) -> (i32, i32) {
    %c0_i32 = arith.constant 0 : i32
    %c0_i32_0 = arith.constant 0 : i32
    %c0_i32_1 = arith.constant 0 : i32
    return %c0_i32, %c0_i32_0 : i32, i32
  }
  func.func @transform_5(%arg0: i32) -> (i32, i32) {
    %c0_i32 = arith.constant 0 : i32
    %c0_i32_0 = arith.constant 0 : i32
    %c0_i32_1 = arith.constant 0 : i32
    return %c0_i32, %c0_i32_0 : i32, i32
  }
  func.func @transform_6(%arg0: i32) -> (i32, i32) {
    %c0_i32 = arith.constant 0 : i32
    %c0_i32_0 = arith.constant 0 : i32
    %c0_i32_1 = arith.constant 0 : i32
    return %c0_i32, %c0_i32_0 : i32, i32
  }
  func.func @transform_7(%arg0: i32) -> (i32, i32) {
    %c0_i32 = arith.constant 0 : i32
    %c0_i32_0 = arith.constant 0 : i32
    %c0_i32_1 = arith.constant 0 : i32
    return %c0_i32, %c0_i32_0 : i32, i32
  }
  func.func @transform_8(%arg0: i32) -> (i32, i32, i32) {
    %c0_i32 = arith.constant 0 : i32
    %c0_i32_0 = arith.constant 0 : i32
    %c0_i32_1 = arith.constant 0 : i32
    return %arg0, %c0_i32, %c0_i32_0 : i32, i32, i32
  }
}

</mosaic_0001>

<llo_original>
// kernel: tpu_custom_call.1
$region0: #{tpu_custom_call.1}
  #allocation0 [shape = 'u32[]', space=smem, size = 0x4, offset = 0x4, fixed_abs, tag = 'smem constant byte address 0x4 - core index']
  #allocation1 [shape = 'u32[144,128]{1,0:T(1,128)}', space=vmem, size = 0x12000, scoped, tag = 'internal scratch']
  %s0 = inlined_call_operand.hbm [shape: f32[2,8,128], index: 0, kind: input, shape index: {}]
  %s1 = inlined_call_operand.hbm [shape: f32[2,8,128], index: 1, kind: input, shape index: {}]
  %s2 = inlined_call_operand.hbm [shape: f32[128,128], index: 2, kind: input, shape index: {}]
  %s3 = inlined_call_operand.vmem [shape: f32[1,128], index: 3, kind: input, shape index: {}]
  %s4 = inlined_call_operand.hbm [shape: f32[128,256], index: 4, kind: input, shape index: {}]
  %s5 = inlined_call_operand.vmem [shape: f32[1,256], index: 5, kind: input, shape index: {}]
  %s6 = inlined_call_operand.hbm [shape: f32[128,128], index: 6, kind: input, shape index: {}]
  %s7 = inlined_call_operand.vmem [shape: f32[1,128], index: 7, kind: input, shape index: {}]
  %s8 = inlined_call_operand.hbm [shape: f32[2,8,128], index: 8, kind: output, shape index: {}]
  %s9 = sld [smem:[#allocation0]]
  $region85: #{tpu_custom_call.1} parent=0
    _
  %s11 = ssub.s32 1, %s9
  %s12 = scalar_select 0, %s11, %s9
  $region1: #{tpu_custom_call.1} parent=0
    #allocation2 [shape = 'u8[8192]{0}', space=vmem, size = 0x2000, scoped, tag = 'input window, operand 0']
    #allocation3 [shape = 's32[2]{0}', space=sflag, size = 0x8, scoped, tag = 'scoped memory for tpu_custom_call.1']
    #allocation4 [shape = 's32[2]{0}', space=sflag, size = 0x8, scoped, tag = 'scoped memory for tpu_custom_call.1']
    #allocation5 [shape = 'u8[8192]{0}', space=vmem, size = 0x2000, scoped, tag = 'input window, operand 1']
    #allocation6 [shape = 's32[2]{0}', space=sflag, size = 0x8, scoped, tag = 'scoped memory for tpu_custom_call.1']
    #allocation7 [shape = 'u8[65536]{0}', space=vmem, size = 0x10000, scoped, tag = 'input window, operand 2, single buffered']
    #allocation8 [shape = 'u8[131072]{0}', space=vmem, size = 0x20000, scoped, tag = 'input window, operand 4, single buffered']
    #allocation9 [shape = 's32[1]{0}', space=sflag, size = 0x4, scoped, tag = 'scoped memory for tpu_custom_call.1']
    #allocation10 [shape = 'u8[65536]{0}', space=vmem, size = 0x10000, scoped, tag = 'input window, operand 6, single buffered']
    #allocation11 [shape = 'u8[8192]{0}', space=vmem, size = 0x2000, scoped, tag = 'output window, operand 0']
    %13 = vsyncpa [#allocation3], 0
    %s14 = scalar_lea.sflag [#allocation3], 1
    %15 = vsyncpa %s14, 0
    %16 = vsyncpa [#allocation6], 0
    %s17 = scalar_lea.sflag [#allocation6], 1
    %18 = vsyncpa %s17, 0
    %19 = vsyncpa [#allocation9], 0
    %20 = vsyncpa [#allocation4], 0
    %s21 = scalar_lea.sflag [#allocation4], 1
    %22 = vsyncpa %s21, 0
    loop: start=0, step=1, limit=4
    $region2: #{tpu_custom_call.1} parent=1 // loop_pre_header
      _
    $region3: #{tpu_custom_call.1} parent=1 // loop_header
      %s24 = sphi 0, %s28
      %p25 = scmp.ge.s32.totalorder %s24, 4
      %s34 = sphi 0, %s36
      %s37 = sphi 0, %s34
      %s38 = sphi 0, %s37
      %s54 = sphi 0, %s38
      %s60 = sphi 0, %s62
      %s63 = sphi 0, %s60
      %s64 = sphi 0, %s63
      %s80 = sphi 0, %s64
      %s84 = sphi 0, %s84
      %s86 = sphi 0, %s84
      %s87 = sphi 0, %s86
      %s101 = sphi 0, %s87
      %s105 = sphi 0, %s105
      %s107 = sphi 0, %s105
      %s108 = sphi 0, %s107
      %s122 = sphi 0, %s108
      %s126 = sphi 0, %s126
      %s128 = sphi 0, %s126
      %s129 = sphi 0, %s128
      %s143 = sphi 0, %s129
      %s147 = sphi 0, %s147
      %s149 = sphi 0, %s147
      %s150 = sphi 0, %s149
      %s164 = sphi 0, %s150
      %s168 = sphi 0, %s168
      %s170 = sphi 0, %s168
      %s171 = sphi 0, %s170
      %s185 = sphi 0, %s171
      %s189 = sphi 0, %s189
      %s191 = sphi 0, %s189
      %s192 = sphi 0, %s191
      %s206 = sphi 0, %s192
      %s212 = sphi 0, %s214
      %s215 = sphi 0, %s212
      %s216 = sphi 0, %s215
      %s232 = sphi 0, %s216
    $region4: #{tpu_custom_call.1} parent=1 // loop_header_branch
      %27 = sbr.rel (%p25) target = $region8
    $region5: #{tpu_custom_call.1} parent=1 // loop_body
      %s29 = ssub.s32 %s24, 1
      %s30 = ssub.s32 %s24, 2
      %s31 = sadd.s32 %s24, 1
      %s32 = ssub.s32 %s24, %s31
      %p33 = scmp.eq.s32.totalorder %s32, 0
      %s35 = sadd.s32 %s34, 1
      %s36 = scalar_select %p33, %s34, %s35
      %p39 = pneg %p33
      %p40 = scmp.eq.s32.totalorder %s24, 1
      %p41 = por %p39, %p40
      %p42 = scmp.ne.s32.totalorder %s34, %s37
      %p43 = scmp.eq.s32.totalorder %s24, 0
      %p44 = por %p42, %p43
      %p45 = scmp.ne.s32.totalorder %s34, %s37
      %p46 = scmp.eq.s32.totalorder %s29, 1
      %p47 = por %p45, %p46
      %p48 = scmp.ne.s32.totalorder %s37, %s38
      %p49 = scmp.eq.s32.totalorder %s29, 0
      %p50 = por %p48, %p49
      %p51 = scmp.ne.s32.totalorder %s37, %s38
      %p52 = scmp.eq.s32.totalorder %s30, 1
      %p53 = por %p51, %p52
      %p55 = scmp.ne.s32.totalorder %s38, %s54
      %p56 = scmp.eq.s32.totalorder %s30, 0
      %p57 = por %p55, %p56
      %s58 = ssub.s32 %s24, %s31
      %p59 = scmp.eq.s32.totalorder %s58, 0
      %s61 = sadd.s32 %s60, 1
      %s62 = scalar_select %p59, %s60, %s61
      %p65 = pneg %p59
      %p66 = scmp.eq.s32.totalorder %s24, 1
      %p67 = por %p65, %p66
      %p68 = scmp.ne.s32.totalorder %s60, %s63
      %p69 = scmp.eq.s32.totalorder %s24, 0
      %p70 = por %p68, %p69
      %p71 = scmp.ne.s32.totalorder %s60, %s63
      %p72 = scmp.eq.s32.totalorder %s29, 1
      %p73 = por %p71, %p72
      %p74 = scmp.ne.s32.totalorder %s63, %s64
      %p75 = scmp.eq.s32.totalorder %s29, 0
      %p76 = por %p74, %p75
      %p77 = scmp.ne.s32.totalorder %s63, %s64
      %p78 = scmp.eq.s32.totalorder %s30, 1
      %p79 = por %p77, %p78
      %p81 = scmp.ne.s32.totalorder %s64, %s80
      %p82 = scmp.eq.s32.totalorder %s30, 0
      %p83 = por %p81, %p82
      %s85 = sadd.s32 %s84, 1
      %p88 = scmp.eq.s32.totalorder %s24, 1
      %p89 = scmp.ne.s32.totalorder %s84, %s86
      %p90 = scmp.eq.s32.totalorder %s24, 0
      %p91 = por %p89, %p90
      %p92 = scmp.ne.s32.totalorder %s84, %s86
      %p93 = scmp.eq.s32.totalorder %s29, 1
      %p94 = por %p92, %p93
      %p95 = scmp.ne.s32.totalorder %s86, %s87
      %p96 = scmp.eq.s32.totalorder %s29, 0
      %p97 = por %p95, %p96
      %p98 = scmp.ne.s32.totalorder %s86, %s87
      %p99 = scmp.eq.s32.totalorder %s30, 1
      %p100 = por %p98, %p99
      %p102 = scmp.ne.s32.totalorder %s87, %s101
      %p103 = scmp.eq.s32.totalorder %s30, 0
      %p104 = por %p102, %p103
      %s106 = sadd.s32 %s105, 1
      %p109 = scmp.eq.s32.totalorder %s24, 1
      %p110 = scmp.ne.s32.totalorder %s105, %s107
      %p111 = scmp.eq.s32.totalorder %s24, 0
      %p112 = por %p110, %p111
      %p113 = scmp.ne.s32.totalorder %s105, %s107
      %p114 = scmp.eq.s32.totalorder %s29, 1
      %p115 = por %p113, %p114
      %p116 = scmp.ne.s32.totalorder %s107, %s108
      %p117 = scmp.eq.s32.totalorder %s29, 0
      %p118 = por %p116, %p117
      %p119 = scmp.ne.s32.totalorder %s107, %s108
      %p120 = scmp.eq.s32.totalorder %s30, 1
      %p121 = por %p119, %p120
      %p123 = scmp.ne.s32.totalorder %s108, %s122
      %p124 = scmp.eq.s32.totalorder %s30, 0
      %p125 = por %p123, %p124
      %s127 = sadd.s32 %s126, 1
      %p130 = scmp.eq.s32.totalorder %s24, 1
      %p131 = scmp.ne.s32.totalorder %s126, %s128
      %p132 = scmp.eq.s32.totalorder %s24, 0
      %p133 = por %p131, %p132
      %p134 = scmp.ne.s32.totalorder %s126, %s128
      %p135 = scmp.eq.s32.totalorder %s29, 1
      %p136 = por %p134, %p135
      %p137 = scmp.ne.s32.totalorder %s128, %s129
      %p138 = scmp.eq.s32.totalorder %s29, 0
      %p139 = por %p137, %p138
      %p140 = scmp.ne.s32.totalorder %s128, %s129
      %p141 = scmp.eq.s32.totalorder %s30, 1
      %p142 = por %p140, %p141
      %p144 = scmp.ne.s32.totalorder %s129, %s143
      %p145 = scmp.eq.s32.totalorder %s30, 0
      %p146 = por %p144, %p145
      %s148 = sadd.s32 %s147, 1
      %p151 = scmp.eq.s32.totalorder %s24, 1
      %p152 = scmp.ne.s32.totalorder %s147, %s149
      %p153 = scmp.eq.s32.totalorder %s24, 0
      %p154 = por %p152, %p153
      %p155 = scmp.ne.s32.totalorder %s147, %s149
      %p156 = scmp.eq.s32.totalorder %s29, 1
      %p157 = por %p155, %p156
      %p158 = scmp.ne.s32.totalorder %s149, %s150
      %p159 = scmp.eq.s32.totalorder %s29, 0
      %p160 = por %p158, %p159
      %p161 = scmp.ne.s32.totalorder %s149, %s150
      %p162 = scmp.eq.s32.totalorder %s30, 1
      %p163 = por %p161, %p162
      %p165 = scmp.ne.s32.totalorder %s150, %s164
      %p166 = scmp.eq.s32.totalorder %s30, 0
      %p167 = por %p165, %p166
      %s169 = sadd.s32 %s168, 1
      %p172 = scmp.eq.s32.totalorder %s24, 1
      %p173 = scmp.ne.s32.totalorder %s168, %s170
      %p174 = scmp.eq.s32.totalorder %s24, 0
      %p175 = por %p173, %p174
      %p176 = scmp.ne.s32.totalorder %s168, %s170
      %p177 = scmp.eq.s32.totalorder %s29, 1
      %p178 = por %p176, %p177
      %p179 = scmp.ne.s32.totalorder %s170, %s171
      %p180 = scmp.eq.s32.totalorder %s29, 0
      %p181 = por %p179, %p180
      %p182 = scmp.ne.s32.totalorder %s170, %s171
      %p183 = scmp.eq.s32.totalorder %s30, 1
      %p184 = por %p182, %p183
      %p186 = scmp.ne.s32.totalorder %s171, %s185
      %p187 = scmp.eq.s32.totalorder %s30, 0
      %p188 = por %p186, %p187
      %s190 = sadd.s32 %s189, 1
      %p193 = scmp.eq.s32.totalorder %s24, 1
      %p194 = scmp.ne.s32.totalorder %s189, %s191
      %p195 = scmp.eq.s32.totalorder %s24, 0
      %p196 = por %p194, %p195
      %p197 = scmp.ne.s32.totalorder %s189, %s191
      %p198 = scmp.eq.s32.totalorder %s29, 1
      %p199 = por %p197, %p198
      %p200 = scmp.ne.s32.totalorder %s191, %s192
      %p201 = scmp.eq.s32.totalorder %s29, 0
      %p202 = por %p200, %p201
      %p203 = scmp.ne.s32.totalorder %s191, %s192
      %p204 = scmp.eq.s32.totalorder %s30, 1
      %p205 = por %p203, %p204
      %p207 = scmp.ne.s32.totalorder %s192, %s206
      %p208 = scmp.eq.s32.totalorder %s30, 0
      %p209 = por %p207, %p208
      %s210 = ssub.s32 %s24, %s31
      %p211 = scmp.eq.s32.totalorder %s210, 0
      %s213 = sadd.s32 %s212, 1
      %s214 = scalar_select %p211, %s212, %s213
      %p217 = pneg %p211
      %p218 = scmp.eq.s32.totalorder %s24, 1
      %p219 = por %p217, %p218
      %p220 = scmp.ne.s32.totalorder %s212, %s215
      %p221 = scmp.eq.s32.totalorder %s24, 0
      %p222 = por %p220, %p221
      %p223 = scmp.ne.s32.totalorder %s212, %s215
      %p224 = scmp.eq.s32.totalorder %s29, 1
      %p225 = por %p223, %p224
      %p226 = scmp.ne.s32.totalorder %s215, %s216
      %p227 = scmp.eq.s32.totalorder %s29, 0
      %p228 = por %p226, %p227
      %p229 = scmp.ne.s32.totalorder %s215, %s216
      %p230 = scmp.eq.s32.totalorder %s30, 1
      %p231 = por %p229, %p230
      %p233 = scmp.ne.s32.totalorder %s216, %s232
      %p234 = scmp.eq.s32.totalorder %s30, 0
      %p235 = por %p233, %p234
      %p236 = scmp.le.s32.totalorder 1, %s24
      %p237 = scmp.lt.s32.totalorder %s24, 3
      %p238 = pnand %p236, %p237
      %p239 = pneg %p238
      // Predicated region
      $region9: #{tpu_custom_call.1} parent=5 // pred_check
        _
      $region10: #{tpu_custom_call.1} parent=5 // pred_check_branch
        %241 = sbr.rel (%p238) target = $region12
      $region11: #{tpu_custom_call.1} parent=5 // pred_region
        %s242 = ssub.s32 %s24, 1
        // Predicated region
        $region13: #{tpu_custom_call.1} parent=11 // pred_check
          %p243 = pneg %p97
        $region14: #{tpu_custom_call.1} parent=11 // pred_check_branch
          %245 = sbr.rel (%p243) target = $region16
        $region15: #{tpu_custom_call.1} parent=11 // pred_region
          %s247 = ssub.s32 2048, 2048
          %248 = vsyncadd [#allocation6], %s247
          %s249 = sshll.u32 [#allocation7], 4
          %s250 = int_to_ptr.vmem [resolvable:$true] %s249
          %255 = dma.hbm_to_vmem [thread:$0]  %s2, 2048, %s250, [#allocation6], 128, 128, 8
        $region16: #{tpu_custom_call.1} parent=11 // pred_fallthru
          _
        // Predicated region
        $region17: #{tpu_custom_call.1} parent=11 // pred_check
          %p256 = pneg %p118
        $region18: #{tpu_custom_call.1} parent=11 // pred_check_branch
          %258 = sbr.rel (%p256) target = $region20
        $region19: #{tpu_custom_call.1} parent=11 // pred_region
          _
        $region20: #{tpu_custom_call.1} parent=11 // pred_fallthru
          _
        // Predicated region
        $region21: #{tpu_custom_call.1} parent=11 // pred_check
          %p259 = pneg %p139
        $region22: #{tpu_custom_call.1} parent=11 // pred_check_branch
          %261 = sbr.rel (%p259) target = $region24
        $region23: #{tpu_custom_call.1} parent=11 // pred_region
          %s263 = ssub.s32 4096, 4096
          %264 = vsyncadd [#allocation9], %s263
          %s265 = sshll.u32 [#allocation8], 4
          %s266 = int_to_ptr.vmem [resolvable:$true] %s265
          %271 = dma.hbm_to_vmem [thread:$0]  %s4, 4096, %s266, [#allocation9], 256, 256, 16
        $region24: #{tpu_custom_call.1} parent=11 // pred_fallthru
          _
        // Predicated region
        $region25: #{tpu_custom_call.1} parent=11 // pred_check
          %p272 = pneg %p160
        $region26: #{tpu_custom_call.1} parent=11 // pred_check_branch
          %274 = sbr.rel (%p272) target = $region28
        $region27: #{tpu_custom_call.1} parent=11 // pred_region
          _
        $region28: #{tpu_custom_call.1} parent=11 // pred_fallthru
          _
        // Predicated region
        $region29: #{tpu_custom_call.1} parent=11 // pred_check
          %p275 = pneg %p181
        $region30: #{tpu_custom_call.1} parent=11 // pred_check_branch
          %277 = sbr.rel (%p275) target = $region32
        $region31: #{tpu_custom_call.1} parent=11 // pred_region
          %s279 = ssub.s32 2048, 2048
          %280 = vsyncadd [#allocation9], %s279
          %s281 = sshll.u32 [#allocation10], 4
          %s282 = int_to_ptr.vmem [resolvable:$true] %s281
          %287 = dma.hbm_to_vmem [thread:$0]  %s6, 2048, %s282, [#allocation9], 128, 128, 8
        $region32: #{tpu_custom_call.1} parent=11 // pred_fallthru
          _
        // Predicated region
        $region33: #{tpu_custom_call.1} parent=11 // pred_check
          %p288 = pneg %p202
        $region34: #{tpu_custom_call.1} parent=11 // pred_check_branch
          %290 = sbr.rel (%p288) target = $region36
        $region35: #{tpu_custom_call.1} parent=11 // pred_region
          _
        $region36: #{tpu_custom_call.1} parent=11 // pred_fallthru
          _
      $region12: #{tpu_custom_call.1} parent=5 // pred_fallthru
        _
      %p291 = scmp.lt.s32.totalorder %s24, 2
      // Predicated region
      $region37: #{tpu_custom_call.1} parent=5 // pred_check
        %p292 = pneg %p291
      $region38: #{tpu_custom_call.1} parent=5 // pred_check_branch
        %294 = sbr.rel (%p292) target = $region40
      $region39: #{tpu_custom_call.1} parent=5 // pred_region
        // Predicated region
        $region41: #{tpu_custom_call.1} parent=39 // pred_check
          %p295 = pneg %p44
        $region42: #{tpu_custom_call.1} parent=39 // pred_check_branch
          %297 = sbr.rel (%p295) target = $region44
        $region43: #{tpu_custom_call.1} parent=39 // pred_region
          %s298 = sand.u32 %s34, 1
          %s299 = scalar_lea.sflag [#allocation3], %s298
          %s300 = sand.u32 %s34, 1
          %s301 = smul.addr %s300, 8
          %s302 = scalar_lea.vmem [#allocation2], %s301
          %s304 = ssub.s32 128, 128
          %305 = vsyncadd %s299, %s304
          %s306 = smul.addr %s24, 128
          %s307 = scalar_lea.hbm %s0, %s306
          %s309 = sshll.u32 %s302, 4
          %s310 = int_to_ptr.vmem [resolvable:$true] %s309
          %312 = dma.hbm_to_vmem [thread:$0]  %s307, 128, %s310, %s299
        $region44: #{tpu_custom_call.1} parent=39 // pred_fallthru
          _
        // Predicated region
        $region45: #{tpu_custom_call.1} parent=39 // pred_check
          %p313 = pneg %p70
        $region46: #{tpu_custom_call.1} parent=39 // pred_check_branch
          %315 = sbr.rel (%p313) target = $region48
        $region47: #{tpu_custom_call.1} parent=39 // pred_region
          %s316 = sand.u32 %s24, 1
          %s317 = scalar_lea.sflag [#allocation6], %s316
          %s318 = sand.u32 %s60, 1
          %s319 = smul.addr %s318, 8
          %s320 = scalar_lea.vmem [#allocation5], %s319
          %s322 = ssub.s32 128, 128
          %323 = vsyncadd %s317, %s322
          %s324 = smul.addr %s24, 128
          %s325 = scalar_lea.hbm %s1, %s324
          %s327 = sshll.u32 %s320, 4
          %s328 = int_to_ptr.vmem [resolvable:$true] %s327
          %330 = dma.hbm_to_vmem [thread:$0]  %s325, 128, %s328, %s317
        $region48: #{tpu_custom_call.1} parent=39 // pred_fallthru
          _
      $region40: #{tpu_custom_call.1} parent=5 // pred_fallthru
        _
      %p331 = scmp.le.s32.totalorder 1, %s24
      %p332 = scmp.lt.s32.totalorder %s24, 3
      %p333 = pnand %p331, %p332
      %p334 = pneg %p333
      // Predicated region
      $region49: #{tpu_custom_call.1} parent=5 // pred_check
        _
      $region50: #{tpu_custom_call.1} parent=5 // pred_check_branch
        %336 = sbr.rel (%p333) target = $region52
      $region51: #{tpu_custom_call.1} parent=5 // pred_region
        %s337 = ssub.s32 %s24, 1
        %s338 = sand.u32 %s37, 1
        %s339 = scalar_lea.sflag [#allocation3], %s338
        %s340 = sand.u32 %s37, 1
        %s341 = smul.addr %s340, 8
        %s342 = scalar_lea.vmem [#allocation2], %s341
        // Predicated region
        $region53: #{tpu_custom_call.1} parent=51 // pred_check
          %p343 = pneg %p50
        $region54: #{tpu_custom_call.1} parent=51 // pred_check_branch
          %345 = sbr.rel (%p343) target = $region56
        $region55: #{tpu_custom_call.1} parent=51 // pred_region
          %346 = dma.done %s339, 128
        $region56: #{tpu_custom_call.1} parent=51 // pred_fallthru
          _
        %s347 = sand.u32 %s29, 1
        %s348 = scalar_lea.sflag [#allocation6], %s347
        %s349 = sand.u32 %s63, 1
        %s350 = smul.addr %s349, 8
        %s351 = scalar_lea.vmem [#allocation5], %s350
        // Predicated region
        $region57: #{tpu_custom_call.1} parent=51 // pred_check
          %p352 = pneg %p76
        $region58: #{tpu_custom_call.1} parent=51 // pred_check_branch
          %354 = sbr.rel (%p352) target = $region60
        $region59: #{tpu_custom_call.1} parent=51 // pred_region
          %355 = dma.done %s348, 128
        $region60: #{tpu_custom_call.1} parent=51 // pred_fallthru
          _
        // Predicated region
        $region61: #{tpu_custom_call.1} parent=51 // pred_check
          %p356 = pneg %p97
        $region62: #{tpu_custom_call.1} parent=51 // pred_check_branch
          %358 = sbr.rel (%p356) target = $region64
        $region63: #{tpu_custom_call.1} parent=51 // pred_region
          %359 = dma.done [#allocation6], 2048
        $region64: #{tpu_custom_call.1} parent=51 // pred_fallthru
          _
        // Predicated region
        $region65: #{tpu_custom_call.1} parent=51 // pred_check
          %p360 = pneg %p139
        $region66: #{tpu_custom_call.1} parent=51 // pred_check_branch
          %362 = sbr.rel (%p360) target = $region68
        $region67: #{tpu_custom_call.1} parent=51 // pred_region
          %363 = dma.done [#allocation9], 4096
        $region68: #{tpu_custom_call.1} parent=51 // pred_fallthru
          _
        // Predicated region
        $region69: #{tpu_custom_call.1} parent=51 // pred_check
          %p364 = pneg %p181
        $region70: #{tpu_custom_call.1} parent=51 // pred_check_branch
          %366 = sbr.rel (%p364) target = $region72
        $region71: #{tpu_custom_call.1} parent=51 // pred_region
          %367 = dma.done [#allocation9], 2048
        $region72: #{tpu_custom_call.1} parent=51 // pred_fallthru
          _
        %s368 = sand.u32 %s37, 1
        %s369 = scalar_lea.sflag [#allocation3], %s368
        %s370 = sand.u32 %s37, 1
        %s371 = smul.addr %s370, 8
        %s372 = scalar_lea.vmem [#allocation2], %s371
        %p373 = pneg %p50
        %p374 = pneg %p47
        %s375 = sand.u32 %s29, 1
        %s376 = scalar_lea.sflag [#allocation6], %s375
        %s377 = sand.u32 %s63, 1
        %s378 = smul.addr %s377, 8
        %s379 = scalar_lea.vmem [#allocation5], %s378
        %p380 = pneg %p76
        %p381 = pneg %p73
        %p382 = pneg %p97
        %p383 = pneg %p94
        %p384 = pneg %p118
        %p385 = pneg %p115
        %p386 = pneg %p139
        %p387 = pneg %p136
        %p388 = pneg %p160
        %p389 = pneg %p157
        %p390 = pneg %p181
        %p391 = pneg %p178
        %p392 = pneg %p202
        %p393 = pneg %p199
        %p394 = pneg %p228
        %p395 = pneg %p225
        %s396 = sand.u32 %s215, 1
        %s397 = scalar_lea.sflag [#allocation4], %s396
        %s398 = sand.u32 %s215, 1
        %s399 = smul.addr %s398, 8
        %s400 = scalar_lea.vmem [#allocation11], %s399
        %v401 = vld [vmem:[%s342] sm:$0xff]
        %v402 = vld [vmem:[%s351] sm:$0xff]
        %v403 = vld [vmem:[#allocation7] sm:$0xff]
        %v404 = vld [vmem:[#allocation7 + $0x8] sm:$0xff]
        %v405 = vld [vmem:[#allocation7 + $0x10] sm:$0xff]
        %v406 = vld [vmem:[#allocation7 + $0x18] sm:$0xff]
        %v407 = vld [vmem:[#allocation7 + $0x20] sm:$0xff]
        %v408 = vld [vmem:[#allocation7 + $0x28] sm:$0xff]
        %v409 = vld [vmem:[#allocation7 + $0x30] sm:$0xff]
        %v410 = vld [vmem:[#allocation7 + $0x38] sm:$0xff]
        %v411 = vld [vmem:[#allocation7 + $0x40] sm:$0xff]
        %v412 = vld [vmem:[#allocation7 + $0x48] sm:$0xff]
        %v413 = vld [vmem:[#allocation7 + $0x50] sm:$0xff]
        %v414 = vld [vmem:[#allocation7 + $0x58] sm:$0xff]
        %v415 = vld [vmem:[#allocation7 + $0x60] sm:$0xff]
        %v416 = vld [vmem:[#allocation7 + $0x68] sm:$0xff]
        %v417 = vld [vmem:[#allocation7 + $0x70] sm:$0xff]
        %v418 = vld [vmem:[#allocation7 + $0x78] sm:$0xff]
        %v419 = vld [vmem:[%s3] sm:$0x1]
        %v421 = vlaneseq
        %v422 = vshrl.u32 %v421, 7
        %v423 = vsub.s32 0, %v422
        %v424 = vrot.slane %v419, %v423
        %426 = vmatprep.subr.mxu0 0.0
        %427 = vmatpush1.msra.mxu0 %v403
        %428 = vmatprep.subr.mxu0 0.0
        %429 = vmatpush1.msra.mxu0 %v404
        %430 = vmatprep.subr.mxu0 0.0
        %431 = vmatpush1.msra.mxu0 %v405
        %432 = vmatprep.subr.mxu0 0.0
        %433 = vmatpush1.msra.mxu0 %v406
        %434 = vmatprep.subr.mxu0 0.0
        %435 = vmatpush1.msra.mxu0 %v407
        %436 = vmatprep.subr.mxu0 0.0
        %437 = vmatpush1.msra.mxu0 %v408
        %438 = vmatprep.subr.mxu0 0.0
        %439 = vmatpush1.msra.mxu0 %v409
        %440 = vmatprep.subr.mxu0 0.0
        %441 = vmatpush1.msra.mxu0 %v410
        %442 = vmatprep.subr.mxu0 0.0
        %443 = vmatpush1.msra.mxu0 %v411
        %444 = vmatprep.subr.mxu0 0.0
        %445 = vmatpush1.msra.mxu0 %v412
        %446 = vmatprep.subr.mxu0 0.0
        %447 = vmatpush1.msra.mxu0 %v413
        %448 = vmatprep.subr.mxu0 0.0
        %449 = vmatpush1.msra.mxu0 %v414
        %450 = vmatprep.subr.mxu0 0.0
        %451 = vmatpush1.msra.mxu0 %v415
        %452 = vmatprep.subr.mxu0 0.0
        %453 = vmatpush1.msra.mxu0 %v416
        %454 = vmatprep.subr.mxu0 0.0
        %455 = vmatpush1.msra.mxu0 %v417
        %456 = vmatprep.subr.mxu0 0.0
        %457 = vmatpush1.msra.mxu0 %v418
        %458 = vmatprep.subr.mxu0 0.0
        %459 = vmatpush1.msra.mxu0 0.0
        %460 = vmatprep.subr.mxu0 0.0
        %461 = vmatpush1.msra.mxu0 0.0
        %462 = vmatprep.subr.mxu0 0.0
        %463 = vmatpush1.msra.mxu0 0.0
        %464 = vmatprep.subr.mxu0 0.0
        %465 = vmatpush1.msra.mxu0 0.0
        %466 = vmatprep.subr.mxu0 0.0
        %467 = vmatpush1.msra.mxu0 0.0
        %468 = vmatprep.subr.mxu0 0.0
        %469 = vmatpush1.msra.mxu0 0.0
        %470 = vmatprep.subr.mxu0 0.0
        %471 = vmatpush1.msra.mxu0 0.0
        %472 = vmatprep.subr.mxu0 0.0
        %473 = vmatpush1.msra.mxu0 0.0
        %474 = vmatprep.subr.mxu0 0.0
        %475 = vmatpush1.msra.mxu0 0.0
        %476 = vmatprep.subr.mxu0 0.0
        %477 = vmatpush1.msra.mxu0 0.0
        %478 = vmatprep.subr.mxu0 0.0
        %479 = vmatpush1.msra.mxu0 0.0
        %480 = vmatprep.subr.mxu0 0.0
        %481 = vmatpush1.msra.mxu0 0.0
        %482 = vmatprep.subr.mxu0 0.0
        %483 = vmatpush1.msra.mxu0 0.0
        %484 = vmatprep.subr.mxu0 0.0
        %485 = vmatpush1.msra.mxu0 0.0
        %486 = vmatprep.subr.mxu0 0.0
        %487 = vmatpush1.msra.mxu0 0.0
        %488 = vmatprep.subr.mxu0 0.0
        %489 = vmatpush1.msra.mxu0 0.0
        %490 = vmatprep.mubr.f32.mxu0 0.0
        %491 = vmatmul.mubr.f32.gmra.mrb[0].mxu0 %v401
        %v492 = vpop.f32.mrb[0].mxu0
        %v493 = vadd.f32 %v424, %v492
        %v494 = vpop.f32.mrb[0].mxu0
        %495 = vdwg.mxu0
        %v496 = vld [vmem:[#allocation8] sm:$0xff]
        %v497 = vld [vmem:[#allocation8 + $0x8] sm:$0xff]
        %v498 = vld [vmem:[#allocation8 + $0x10] sm:$0xff]
        %v499 = vld [vmem:[#allocation8 + $0x18] sm:$0xff]
        %v500 = vld [vmem:[#allocation8 + $0x20] sm:$0xff]
        %v501 = vld [vmem:[#allocation8 + $0x28] sm:$0xff]
        %v502 = vld [vmem:[#allocation8 + $0x30] sm:$0xff]
        %v503 = vld [vmem:[#allocation8 + $0x38] sm:$0xff]
        %v504 = vld [vmem:[#allocation8 + $0x40] sm:$0xff]
        %v505 = vld [vmem:[#allocation8 + $0x48] sm:$0xff]
        %v506 = vld [vmem:[#allocation8 + $0x50] sm:$0xff]
        %v507 = vld [vmem:[#allocation8 + $0x58] sm:$0xff]
        %v508 = vld [vmem:[#allocation8 + $0x60] sm:$0xff]
        %v509 = vld [vmem:[#allocation8 + $0x68] sm:$0xff]
        %v510 = vld [vmem:[#allocation8 + $0x70] sm:$0xff]
        %v511 = vld [vmem:[#allocation8 + $0x78] sm:$0xff]
        %v512 = vld [vmem:[#allocation8 + $0x80] sm:$0xff]
        %v513 = vld [vmem:[#allocation8 + $0x88] sm:$0xff]
        %v514 = vld [vmem:[#allocation8 + $0x90] sm:$0xff]
        %v515 = vld [vmem:[#allocation8 + $0x98] sm:$0xff]
        %v516 = vld [vmem:[#allocation8 + $0xa0] sm:$0xff]
        %v517 = vld [vmem:[#allocation8 + $0xa8] sm:$0xff]
        %v518 = vld [vmem:[#allocation8 + $0xb0] sm:$0xff]
        %v519 = vld [vmem:[#allocation8 + $0xb8] sm:$0xff]
        %v520 = vld [vmem:[#allocation8 + $0xc0] sm:$0xff]
        %v521 = vld [vmem:[#allocation8 + $0xc8] sm:$0xff]
        %v522 = vld [vmem:[#allocation8 + $0xd0] sm:$0xff]
        %v523 = vld [vmem:[#allocation8 + $0xd8] sm:$0xff]
        %v524 = vld [vmem:[#allocation8 + $0xe0] sm:$0xff]
        %v525 = vld [vmem:[#allocation8 + $0xe8] sm:$0xff]
        %v526 = vld [vmem:[#allocation8 + $0xf0] sm:$0xff]
        %v527 = vld [vmem:[#allocation8 + $0xf8] sm:$0xff]
        %v528 = vld [vmem:[%s5] sm:$0x3]
        %v530 = vlaneseq
        %v531 = vshrl.u32 %v530, 7
        %v532 = vsub.s32 0, %v531
        %v533 = vrot.slane %v528, %v532
        %v534 = vlaneseq
        %v535 = vshrl.u32 %v534, 7
        %v536 = vsub.s32 1, %v535
        %v537 = vrot.slane %v528, %v536
        %540 = vmatprep.subr.mxu0 %v497
        %541 = vmatpush1.msra.mxu0 %v496
        %542 = vmatprep.subr.mxu0 %v499
        %543 = vmatpush1.msra.mxu0 %v498
        %544 = vmatprep.subr.mxu0 %v501
        %545 = vmatpush1.msra.mxu0 %v500
        %546 = vmatprep.subr.mxu0 %v503
        %547 = vmatpush1.msra.mxu0 %v502
        %548 = vmatprep.subr.mxu0 %v505
        %549 = vmatpush1.msra.mxu0 %v504
        %550 = vmatprep.subr.mxu0 %v507
        %551 = vmatpush1.msra.mxu0 %v506
        %552 = vmatprep.subr.mxu0 %v509
        %553 = vmatpush1.msra.mxu0 %v508
        %554 = vmatprep.subr.mxu0 %v511
        %555 = vmatpush1.msra.mxu0 %v510
        %556 = vmatprep.subr.mxu0 %v513
        %557 = vmatpush1.msra.mxu0 %v512
        %558 = vmatprep.subr.mxu0 %v515
        %559 = vmatpush1.msra.mxu0 %v514
        %560 = vmatprep.subr.mxu0 %v517
        %561 = vmatpush1.msra.mxu0 %v516
        %562 = vmatprep.subr.mxu0 %v519
        %563 = vmatpush1.msra.mxu0 %v518
        %564 = vmatprep.subr.mxu0 %v521
        %565 = vmatpush1.msra.mxu0 %v520
        %566 = vmatprep.subr.mxu0 %v523
        %567 = vmatpush1.msra.mxu0 %v522
        %568 = vmatprep.subr.mxu0 %v525
        %569 = vmatpush1.msra.mxu0 %v524
        %570 = vmatprep.subr.mxu0 %v527
        %571 = vmatpush1.msra.mxu0 %v526
        %572 = vmatprep.subr.mxu0 0.0
        %573 = vmatpush1.msra.mxu0 0.0
        %574 = vmatprep.subr.mxu0 0.0
        %575 = vmatpush1.msra.mxu0 0.0
        %576 = vmatprep.subr.mxu0 0.0
        %577 = vmatpush1.msra.mxu0 0.0
        %578 = vmatprep.subr.mxu0 0.0
        %579 = vmatpush1.msra.mxu0 0.0
        %580 = vmatprep.subr.mxu0 0.0
        %581 = vmatpush1.msra.mxu0 0.0
        %582 = vmatprep.subr.mxu0 0.0
        %583 = vmatpush1.msra.mxu0 0.0
        %584 = vmatprep.subr.mxu0 0.0
        %585 = vmatpush1.msra.mxu0 0.0
        %586 = vmatprep.subr.mxu0 0.0
        %587 = vmatpush1.msra.mxu0 0.0
        %588 = vmatprep.subr.mxu0 0.0
        %589 = vmatpush1.msra.mxu0 0.0
        %590 = vmatprep.subr.mxu0 0.0
        %591 = vmatpush1.msra.mxu0 0.0
        %592 = vmatprep.subr.mxu0 0.0
        %593 = vmatpush1.msra.mxu0 0.0
        %594 = vmatprep.subr.mxu0 0.0
        %595 = vmatpush1.msra.mxu0 0.0
        %596 = vmatprep.subr.mxu0 0.0
        %597 = vmatpush1.msra.mxu0 0.0
        %598 = vmatprep.subr.mxu0 0.0
        %599 = vmatpush1.msra.mxu0 0.0
        %600 = vmatprep.subr.mxu0 0.0
        %601 = vmatpush1.msra.mxu0 0.0
        %602 = vmatprep.subr.mxu0 0.0
        %603 = vmatpush1.msra.mxu0 0.0
        %604 = vmatprep.mubr.f32.mxu0 0.0
        %605 = vmatmul.mubr.f32.gmra.mrb[0].mxu0 %v402
        %v606 = vpop.f32.mrb[0].mxu0
        %v607 = vadd.f32 %v533, %v606
        %v608 = vpop.f32.mrb[0].mxu0
        %v609 = vadd.f32 %v537, %v608
        %610 = vdwg.mxu0
        %v611 = vlaneseq
        %v612 = vand.u32 %v611, 127
        %v613 = vmul.f32 %v493, 0.17677669
        %vm614 = vcmp.ge.s32.totalorder %v612, 0
        %vm615 = vcmp.lt.s32.totalorder %v612, 8
        %vm616 = vmand %vm614, %vm615
        %v617 = vsel %vm616, 1, 0
        %vm618 = vcmp.eq.s32.totalorder %v617, 1
        %v619 = vsel %vm618, %v607, 0.0
        %v620 = vsel %vm618, %v609, 0.0
        %621 = vmatprep.subr.mxu0 0.0
        %622 = vmatpush1.xpose.msra.mxu0 %v619
        %623 = vmatprep.subr.mxu0 0.0
        %624 = vmatpush1.xpose.msra.mxu0 0.0
        %625 = vmatprep.subr.mxu0 0.0
        %626 = vmatpush1.xpose.msra.mxu0 0.0
        %627 = vmatprep.subr.mxu0 0.0
        %628 = vmatpush1.xpose.msra.mxu0 0.0
        %629 = vmatprep.subr.mxu0 0.0
        %630 = vmatpush1.xpose.msra.mxu0 0.0
        %631 = vmatprep.subr.mxu0 0.0
        %632 = vmatpush1.xpose.msra.mxu0 0.0
        %633 = vmatprep.subr.mxu0 0.0
        %634 = vmatpush1.xpose.msra.mxu0 0.0
        %635 = vmatprep.subr.mxu0 0.0
        %636 = vmatpush1.xpose.msra.mxu0 0.0
        %637 = vmatprep.subr.mxu0 0.0
        %638 = vmatpush1.xpose.msra.mxu0 0.0
        %639 = vmatprep.subr.mxu0 0.0
        %640 = vmatpush1.xpose.msra.mxu0 0.0
        %641 = vmatprep.subr.mxu0 0.0
        %642 = vmatpush1.xpose.msra.mxu0 0.0
        %643 = vmatprep.subr.mxu0 0.0
        %644 = vmatpush1.xpose.msra.mxu0 0.0
        %645 = vmatprep.subr.mxu0 0.0
        %646 = vmatpush1.xpose.msra.mxu0 0.0
        %647 = vmatprep.subr.mxu0 0.0
        %648 = vmatpush1.xpose.msra.mxu0 0.0
        %649 = vmatprep.subr.mxu0 0.0
        %650 = vmatpush1.xpose.msra.mxu0 0.0
        %651 = vmatprep.subr.mxu0 0.0
        %652 = vmatpush1.xpose.msra.mxu0 0.0
        %653 = vmatprep.subr.mxu0 0.0
        %654 = vmatpush1.xpose.msra.mxu0 0.0
        %655 = vmatprep.subr.mxu0 0.0
        %656 = vmatpush1.xpose.msra.mxu0 0.0
        %657 = vmatprep.subr.mxu0 0.0
        %658 = vmatpush1.xpose.msra.mxu0 0.0
        %659 = vmatprep.subr.mxu0 0.0
        %660 = vmatpush1.xpose.msra.mxu0 0.0
        %661 = vmatprep.subr.mxu0 0.0
        %662 = vmatpush1.xpose.msra.mxu0 0.0
        %663 = vmatprep.subr.mxu0 0.0
        %664 = vmatpush1.xpose.msra.mxu0 0.0
        %665 = vmatprep.subr.mxu0 0.0
        %666 = vmatpush1.xpose.msra.mxu0 0.0
        %667 = vmatprep.subr.mxu0 0.0
        %668 = vmatpush1.xpose.msra.mxu0 0.0
        %669 = vmatprep.subr.mxu0 0.0
        %670 = vmatpush1.xpose.msra.mxu0 0.0
        %671 = vmatprep.subr.mxu0 0.0
        %672 = vmatpush1.xpose.msra.mxu0 0.0
        %673 = vmatprep.subr.mxu0 0.0
        %674 = vmatpush1.xpose.msra.mxu0 0.0
        %675 = vmatprep.subr.mxu0 0.0
        %676 = vmatpush1.xpose.msra.mxu0 0.0
        %677 = vmatprep.subr.mxu0 0.0
        %678 = vmatpush1.xpose.msra.mxu0 0.0
        %679 = vmatprep.subr.mxu0 0.0
        %680 = vmatpush1.xpose.msra.mxu0 0.0
        %681 = vmatprep.subr.mxu0 0.0
        %682 = vmatpush1.xpose.msra.mxu0 0.0
        %683 = vmatprep.subr.mxu0 0.0
        %684 = vmatpush1.xpose.msra.mxu0 0.0
        %685 = vmatprep.mubr.f32.mxu0 0.0
        %686 = vmatmul.mubr.f32.gmra.mrb[0].mxu0 %v613
        %v687 = vpop.f32.mrb[0].mxu0
        %v688 = vadd.f32 0.0, %v687
        %v689 = vpop.f32.mrb[0].mxu0
        %690 = vdwg.mxu0
        %vm691 = vcmask 64512
        %v692 = vsel %vm691, %v688, -inf
        %693 = vmax.xlane.f32.xlu0 %v692
        %v694 = vpop.xlane.xlu0 %693
        %v695 = vsub.f32 %v688, %v694
        %v696 = vmul.f32 %v695, 1.442695
        %v697 = vpow.pop %v696
        %v698 = vsel %vm691, %v697, 0.0
        %699 = vadd.xlane.f32.xlu0 %v698
        %v700 = vpop.xlane.xlu0 %699
        %v701 = vrcp.pop %v700
        %v702 = vmul.f32 %v697, %v701
        %vm703 = vcmp.ge.s32.totalorder %v612, 8
        %vm704 = vcmp.lt.s32.totalorder %v612, 16
        %vm705 = vmand %vm703, %vm704
        %v706 = vsel %vm705, 1, 0
        %vm707 = vcmp.eq.s32.totalorder %v706, 1
        %v708 = vsel %vm707, %v607, 0.0
        %v709 = vsel %vm707, %v609, 0.0
        %710 = vmatprep.subr.mxu0 0.0
        %711 = vmatpush1.xpose.msra.mxu0 %v708
        %712 = vmatprep.subr.mxu0 0.0
        %713 = vmatpush1.xpose.msra.mxu0 0.0
        %714 = vmatprep.subr.mxu0 0.0
        %715 = vmatpush1.xpose.msra.mxu0 0.0
        %716 = vmatprep.subr.mxu0 0.0
        %717 = vmatpush1.xpose.msra.mxu0 0.0
        %718 = vmatprep.subr.mxu0 0.0
        %719 = vmatpush1.xpose.msra.mxu0 0.0
        %720 = vmatprep.subr.mxu0 0.0
        %721 = vmatpush1.xpose.msra.mxu0 0.0
        %722 = vmatprep.subr.mxu0 0.0
        %723 = vmatpush1.xpose.msra.mxu0 0.0
        %724 = vmatprep.subr.mxu0 0.0
        %725 = vmatpush1.xpose.msra.mxu0 0.0
        %726 = vmatprep.subr.mxu0 0.0
        %727 = vmatpush1.xpose.msra.mxu0 0.0
        %728 = vmatprep.subr.mxu0 0.0
        %729 = vmatpush1.xpose.msra.mxu0 0.0
        %730 = vmatprep.subr.mxu0 0.0
        %731 = vmatpush1.xpose.msra.mxu0 0.0
        %732 = vmatprep.subr.mxu0 0.0
        %733 = vmatpush1.xpose.msra.mxu0 0.0
        %734 = vmatprep.subr.mxu0 0.0
        %735 = vmatpush1.xpose.msra.mxu0 0.0
        %736 = vmatprep.subr.mxu0 0.0
        %737 = vmatpush1.xpose.msra.mxu0 0.0
        %738 = vmatprep.subr.mxu0 0.0
        %739 = vmatpush1.xpose.msra.mxu0 0.0
        %740 = vmatprep.subr.mxu0 0.0
        %741 = vmatpush1.xpose.msra.mxu0 0.0
        %742 = vmatprep.subr.mxu0 0.0
        %743 = vmatpush1.xpose.msra.mxu0 0.0
        %744 = vmatprep.subr.mxu0 0.0
        %745 = vmatpush1.xpose.msra.mxu0 0.0
        %746 = vmatprep.subr.mxu0 0.0
        %747 = vmatpush1.xpose.msra.mxu0 0.0
        %748 = vmatprep.subr.mxu0 0.0
        %749 = vmatpush1.xpose.msra.mxu0 0.0
        %750 = vmatprep.subr.mxu0 0.0
        %751 = vmatpush1.xpose.msra.mxu0 0.0
        %752 = vmatprep.subr.mxu0 0.0
        %753 = vmatpush1.xpose.msra.mxu0 0.0
        %754 = vmatprep.subr.mxu0 0.0
        %755 = vmatpush1.xpose.msra.mxu0 0.0
        %756 = vmatprep.subr.mxu0 0.0
        %757 = vmatpush1.xpose.msra.mxu0 0.0
        %758 = vmatprep.subr.mxu0 0.0
        %759 = vmatpush1.xpose.msra.mxu0 0.0
        %760 = vmatprep.subr.mxu0 0.0
        %761 = vmatpush1.xpose.msra.mxu0 0.0
        %762 = vmatprep.subr.mxu0 0.0
        %763 = vmatpush1.xpose.msra.mxu0 0.0
        %764 = vmatprep.subr.mxu0 0.0
        %765 = vmatpush1.xpose.msra.mxu0 0.0
        %766 = vmatprep.subr.mxu0 0.0
        %767 = vmatpush1.xpose.msra.mxu0 0.0
        %768 = vmatprep.subr.mxu0 0.0
        %769 = vmatpush1.xpose.msra.mxu0 0.0
        %770 = vmatprep.subr.mxu0 0.0
        %771 = vmatpush1.xpose.msra.mxu0 0.0
        %772 = vmatprep.subr.mxu0 0.0
        %773 = vmatpush1.xpose.msra.mxu0 0.0
        %774 = vmatprep.mubr.f32.mxu0 0.0
        %775 = vmatmul.mubr.f32.gmra.mrb[0].mxu0 %v613
        %v776 = vpop.f32.mrb[0].mxu0
        %v777 = vadd.f32 0.0, %v776
        %v778 = vpop.f32.mrb[0].mxu0
        %779 = vdwg.mxu0
        %v780 = vsel %vm691, %v777, -inf
        %781 = vmax.xlane.f32.xlu0 %v780
        %v782 = vpop.xlane.xlu0 %781
        %v783 = vsub.f32 %v777, %v782
        %v784 = vmul.f32 %v783, 1.442695
        %v785 = vpow.pop %v784
        %v786 = vsel %vm691, %v785, 0.0
        %787 = vadd.xlane.f32.xlu0 %v786
        %v788 = vpop.xlane.xlu0 %787
        %v789 = vrcp.pop %v788
        %v790 = vmul.f32 %v785, %v789
        %v792 = vsel %vm691, %v790, 0
        %794 = vmatprep.subr.mxu0 0.0
        %795 = vmatpush1.msra.mxu0 %v709
        %796 = vmatprep.subr.mxu0 0.0
        %797 = vmatpush1.msra.mxu0 0.0
        %798 = vmatprep.subr.mxu0 0.0
        %799 = vmatpush1.msra.mxu0 0.0
        %800 = vmatprep.subr.mxu0 0.0
        %801 = vmatpush1.msra.mxu0 0.0
        %802 = vmatprep.subr.mxu0 0.0
        %803 = vmatpush1.msra.mxu0 0.0
        %804 = vmatprep.subr.mxu0 0.0
        %805 = vmatpush1.msra.mxu0 0.0
        %806 = vmatprep.subr.mxu0 0.0
        %807 = vmatpush1.msra.mxu0 0.0
        %808 = vmatprep.subr.mxu0 0.0
        %809 = vmatpush1.msra.mxu0 0.0
        %810 = vmatprep.subr.mxu0 0.0
        %811 = vmatpush1.msra.mxu0 0.0
        %812 = vmatprep.subr.mxu0 0.0
        %813 = vmatpush1.msra.mxu0 0.0
        %814 = vmatprep.subr.mxu0 0.0
        %815 = vmatpush1.msra.mxu0 0.0
        %816 = vmatprep.subr.mxu0 0.0
        %817 = vmatpush1.msra.mxu0 0.0
        %818 = vmatprep.subr.mxu0 0.0
        %819 = vmatpush1.msra.mxu0 0.0
        %820 = vmatprep.subr.mxu0 0.0
        %821 = vmatpush1.msra.mxu0 0.0
        %822 = vmatprep.subr.mxu0 0.0
        %823 = vmatpush1.msra.mxu0 0.0
        %824 = vmatprep.subr.mxu0 0.0
        %825 = vmatpush1.msra.mxu0 0.0
        %826 = vmatprep.subr.mxu0 0.0
        %827 = vmatpush1.msra.mxu0 0.0
        %828 = vmatprep.subr.mxu0 0.0
        %829 = vmatpush1.msra.mxu0 0.0
        %830 = vmatprep.subr.mxu0 0.0
        %831 = vmatpush1.msra.mxu0 0.0
        %832 = vmatprep.subr.mxu0 0.0
        %833 = vmatpush1.msra.mxu0 0.0
        %834 = vmatprep.subr.mxu0 0.0
        %835 = vmatpush1.msra.mxu0 0.0
        %836 = vmatprep.subr.mxu0 0.0
        %837 = vmatpush1.msra.mxu0 0.0
        %838 = vmatprep.subr.mxu0 0.0
        %839 = vmatpush1.msra.mxu0 0.0
        %840 = vmatprep.subr.mxu0 0.0
        %841 = vmatpush1.msra.mxu0 0.0
        %842 = vmatprep.subr.mxu0 0.0
        %843 = vmatpush1.msra.mxu0 0.0
        %844 = vmatprep.subr.mxu0 0.0
        %845 = vmatpush1.msra.mxu0 0.0
        %846 = vmatprep.subr.mxu0 0.0
        %847 = vmatpush1.msra.mxu0 0.0
        %848 = vmatprep.subr.mxu0 0.0
        %849 = vmatpush1.msra.mxu0 0.0
        %850 = vmatprep.subr.mxu0 0.0
        %851 = vmatpush1.msra.mxu0 0.0
        %852 = vmatprep.subr.mxu0 0.0
        %853 = vmatpush1.msra.mxu0 0.0
        %854 = vmatprep.subr.mxu0 0.0
        %855 = vmatpush1.msra.mxu0 0.0
        %856 = vmatprep.subr.mxu0 0.0
        %857 = vmatpush1.msra.mxu0 0.0
        %858 = vmatprep.mubr.f32.mxu0 0.0
        %859 = vmatmul.mubr.f32.gmra.mrb[0].mxu0 %v792
        %v860 = vpop.f32.mrb[0].mxu0
        %v861 = vadd.f32 0.0, %v860
        %v862 = vpop.f32.mrb[0].mxu0
        %863 = vdwg.mxu0
        %v865 = vsel %vm691, %v702, 0
        %867 = vmatprep.subr.mxu0 0.0
        %868 = vmatpush1.msra.mxu0 %v620
        %869 = vmatprep.subr.mxu0 0.0
        %870 = vmatpush1.msra.mxu0 0.0
        %871 = vmatprep.subr.mxu0 0.0
        %872 = vmatpush1.msra.mxu0 0.0
        %873 = vmatprep.subr.mxu0 0.0
        %874 = vmatpush1.msra.mxu0 0.0
        %875 = vmatprep.subr.mxu0 0.0
        %876 = vmatpush1.msra.mxu0 0.0
        %877 = vmatprep.subr.mxu0 0.0
        %878 = vmatpush1.msra.mxu0 0.0
        %879 = vmatprep.subr.mxu0 0.0
        %880 = vmatpush1.msra.mxu0 0.0
        %881 = vmatprep.subr.mxu0 0.0
        %882 = vmatpush1.msra.mxu0 0.0
        %883 = vmatprep.subr.mxu0 0.0
        %884 = vmatpush1.msra.mxu0 0.0
        %885 = vmatprep.subr.mxu0 0.0
        %886 = vmatpush1.msra.mxu0 0.0
        %887 = vmatprep.subr.mxu0 0.0
        %888 = vmatpush1.msra.mxu0 0.0
        %889 = vmatprep.subr.mxu0 0.0
        %890 = vmatpush1.msra.mxu0 0.0
        %891 = vmatprep.subr.mxu0 0.0
        %892 = vmatpush1.msra.mxu0 0.0
        %893 = vmatprep.subr.mxu0 0.0
        %894 = vmatpush1.msra.mxu0 0.0
        %895 = vmatprep.subr.mxu0 0.0
        %896 = vmatpush1.msra.mxu0 0.0
        %897 = vmatprep.subr.mxu0 0.0
        %898 = vmatpush1.msra.mxu0 0.0
        %899 = vmatprep.subr.mxu0 0.0
        %900 = vmatpush1.msra.mxu0 0.0
        %901 = vmatprep.subr.mxu0 0.0
        %902 = vmatpush1.msra.mxu0 0.0
        %903 = vmatprep.subr.mxu0 0.0
        %904 = vmatpush1.msra.mxu0 0.0
        %905 = vmatprep.subr.mxu0 0.0
        %906 = vmatpush1.msra.mxu0 0.0
        %907 = vmatprep.subr.mxu0 0.0
        %908 = vmatpush1.msra.mxu0 0.0
        %909 = vmatprep.subr.mxu0 0.0
        %910 = vmatpush1.msra.mxu0 0.0
        %911 = vmatprep.subr.mxu0 0.0
        %912 = vmatpush1.msra.mxu0 0.0
        %913 = vmatprep.subr.mxu0 0.0
        %914 = vmatpush1.msra.mxu0 0.0
        %915 = vmatprep.subr.mxu0 0.0
        %916 = vmatpush1.msra.mxu0 0.0
        %917 = vmatprep.subr.mxu0 0.0
        %918 = vmatpush1.msra.mxu0 0.0
        %919 = vmatprep.subr.mxu0 0.0
        %920 = vmatpush1.msra.mxu0 0.0
        %921 = vmatprep.subr.mxu0 0.0
        %922 = vmatpush1.msra.mxu0 0.0
        %923 = vmatprep.subr.mxu0 0.0
        %924 = vmatpush1.msra.mxu0 0.0
        %925 = vmatprep.subr.mxu0 0.0
        %926 = vmatpush1.msra.mxu0 0.0
        %927 = vmatprep.subr.mxu0 0.0
        %928 = vmatpush1.msra.mxu0 0.0
        %929 = vmatprep.subr.mxu0 0.0
        %930 = vmatpush1.msra.mxu0 0.0
        %931 = vmatprep.mubr.f32.mxu0 0.0
        %932 = vmatmul.mubr.f32.gmra.mrb[0].mxu0 %v865
        %v933 = vpop.f32.mrb[0].mxu0
        %v934 = vadd.f32 %v861, %v933
        %v935 = vpop.f32.mrb[0].mxu0
        %936 = vdwg.mxu0
        %vm937 = vcmp.ge.s32.totalorder %v612, 16
        %vm938 = vcmp.lt.s32.totalorder %v612, 24
        %vm939 = vmand %vm937, %vm938
        %v940 = vsel %vm939, 1, 0
        %vm941 = vcmp.eq.s32.totalorder %v940, 1
        %v942 = vsel %vm941, %v607, 0.0
        %v943 = vsel %vm941, %v609, 0.0
        %944 = vmatprep.subr.mxu0 0.0
        %945 = vmatpush1.xpose.msra.mxu0 %v942
        %946 = vmatprep.subr.mxu0 0.0
        %947 = vmatpush1.xpose.msra.mxu0 0.0
        %948 = vmatprep.subr.mxu0 0.0
        %949 = vmatpush1.xpose.msra.mxu0 0.0
        %950 = vmatprep.subr.mxu0 0.0
        %951 = vmatpush1.xpose.msra.mxu0 0.0
        %952 = vmatprep.subr.mxu0 0.0
        %953 = vmatpush1.xpose.msra.mxu0 0.0
        %954 = vmatprep.subr.mxu0 0.0
        %955 = vmatpush1.xpose.msra.mxu0 0.0
        %956 = vmatprep.subr.mxu0 0.0
        %957 = vmatpush1.xpose.msra.mxu0 0.0
        %958 = vmatprep.subr.mxu0 0.0
        %959 = vmatpush1.xpose.msra.mxu0 0.0
        %960 = vmatprep.subr.mxu0 0.0
        %961 = vmatpush1.xpose.msra.mxu0 0.0
        %962 = vmatprep.subr.mxu0 0.0
        %963 = vmatpush1.xpose.msra.mxu0 0.0
        %964 = vmatprep.subr.mxu0 0.0
        %965 = vmatpush1.xpose.msra.mxu0 0.0
        %966 = vmatprep.subr.mxu0 0.0
        %967 = vmatpush1.xpose.msra.mxu0 0.0
        %968 = vmatprep.subr.mxu0 0.0
        %969 = vmatpush1.xpose.msra.mxu0 0.0
        %970 = vmatprep.subr.mxu0 0.0
        %971 = vmatpush1.xpose.msra.mxu0 0.0
        %972 = vmatprep.subr.mxu0 0.0
        %973 = vmatpush1.xpose.msra.mxu0 0.0
        %974 = vmatprep.subr.mxu0 0.0
        %975 = vmatpush1.xpose.msra.mxu0 0.0
        %976 = vmatprep.subr.mxu0 0.0
        %977 = vmatpush1.xpose.msra.mxu0 0.0
        %978 = vmatprep.subr.mxu0 0.0
        %979 = vmatpush1.xpose.msra.mxu0 0.0
        %980 = vmatprep.subr.mxu0 0.0
        %981 = vmatpush1.xpose.msra.mxu0 0.0
        %982 = vmatprep.subr.mxu0 0.0
        %983 = vmatpush1.xpose.msra.mxu0 0.0
        %984 = vmatprep.subr.mxu0 0.0
        %985 = vmatpush1.xpose.msra.mxu0 0.0
        %986 = vmatprep.subr.mxu0 0.0
        %987 = vmatpush1.xpose.msra.mxu0 0.0
        %988 = vmatprep.subr.mxu0 0.0
        %989 = vmatpush1.xpose.msra.mxu0 0.0
        %990 = vmatprep.subr.mxu0 0.0
        %991 = vmatpush1.xpose.msra.mxu0 0.0
        %992 = vmatprep.subr.mxu0 0.0
        %993 = vmatpush1.xpose.msra.mxu0 0.0
        %994 = vmatprep.subr.mxu0 0.0
        %995 = vmatpush1.xpose.msra.mxu0 0.0
        %996 = vmatprep.subr.mxu0 0.0
        %997 = vmatpush1.xpose.msra.mxu0 0.0
        %998 = vmatprep.subr.mxu0 0.0
        %999 = vmatpush1.xpose.msra.mxu0 0.0
        %1000 = vmatprep.subr.mxu0 0.0
        %1001 = vmatpush1.xpose.msra.mxu0 0.0
        %1002 = vmatprep.subr.mxu0 0.0
        %1003 = vmatpush1.xpose.msra.mxu0 0.0
        %1004 = vmatprep.subr.mxu0 0.0
        %1005 = vmatpush1.xpose.msra.mxu0 0.0
        %1006 = vmatprep.subr.mxu0 0.0
        %1007 = vmatpush1.xpose.msra.mxu0 0.0
        %1008 = vmatprep.mubr.f32.mxu0 0.0
        %1009 = vmatmul.mubr.f32.gmra.mrb[0].mxu0 %v613
        %v1010 = vpop.f32.mrb[0].mxu0
        %v1011 = vadd.f32 0.0, %v1010
        %v1012 = vpop.f32.mrb[0].mxu0
        %1013 = vdwg.mxu0
        %v1014 = vsel %vm691, %v1011, -inf
        %1015 = vmax.xlane.f32.xlu0 %v1014
        %v1016 = vpop.xlane.xlu0 %1015
        %v1017 = vsub.f32 %v1011, %v1016
        %v1018 = vmul.f32 %v1017, 1.442695
        %v1019 = vpow.pop %v1018
        %v1020 = vsel %vm691, %v1019, 0.0
        %1021 = vadd.xlane.f32.xlu0 %v1020
        %v1022 = vpop.xlane.xlu0 %1021
        %v1023 = vrcp.pop %v1022
        %v1024 = vmul.f32 %v1019, %v1023
        %v1026 = vsel %vm691, %v1024, 0
        %1028 = vmatprep.subr.mxu0 0.0
        %1029 = vmatpush1.msra.mxu0 %v943
        %1030 = vmatprep.subr.mxu0 0.0
        %1031 = vmatpush1.msra.mxu0 0.0
        %1032 = vmatprep.subr.mxu0 0.0
        %1033 = vmatpush1.msra.mxu0 0.0
        %1034 = vmatprep.subr.mxu0 0.0
        %1035 = vmatpush1.msra.mxu0 0.0
        %1036 = vmatprep.subr.mxu0 0.0
        %1037 = vmatpush1.msra.mxu0 0.0
        %1038 = vmatprep.subr.mxu0 0.0
        %1039 = vmatpush1.msra.mxu0 0.0
        %1040 = vmatprep.subr.mxu0 0.0
        %1041 = vmatpush1.msra.mxu0 0.0
        %1042 = vmatprep.subr.mxu0 0.0
        %1043 = vmatpush1.msra.mxu0 0.0
        %1044 = vmatprep.subr.mxu0 0.0
        %1045 = vmatpush1.msra.mxu0 0.0
        %1046 = vmatprep.subr.mxu0 0.0
        %1047 = vmatpush1.msra.mxu0 0.0
        %1048 = vmatprep.subr.mxu0 0.0
        %1049 = vmatpush1.msra.mxu0 0.0
        %1050 = vmatprep.subr.mxu0 0.0
        %1051 = vmatpush1.msra.mxu0 0.0
        %1052 = vmatprep.subr.mxu0 0.0
        %1053 = vmatpush1.msra.mxu0 0.0
        %1054 = vmatprep.subr.mxu0 0.0
        %1055 = vmatpush1.msra.mxu0 0.0
        %1056 = vmatprep.subr.mxu0 0.0
        %1057 = vmatpush1.msra.mxu0 0.0
        %1058 = vmatprep.subr.mxu0 0.0
        %1059 = vmatpush1.msra.mxu0 0.0
        %1060 = vmatprep.subr.mxu0 0.0
        %1061 = vmatpush1.msra.mxu0 0.0
        %1062 = vmatprep.subr.mxu0 0.0
        %1063 = vmatpush1.msra.mxu0 0.0
        %1064 = vmatprep.subr.mxu0 0.0
        %1065 = vmatpush1.msra.mxu0 0.0
        %1066 = vmatprep.subr.mxu0 0.0
        %1067 = vmatpush1.msra.mxu0 0.0
        %1068 = vmatprep.subr.mxu0 0.0
        %1069 = vmatpush1.msra.mxu0 0.0
        %1070 = vmatprep.subr.mxu0 0.0
        %1071 = vmatpush1.msra.mxu0 0.0
        %1072 = vmatprep.subr.mxu0 0.0
        %1073 = vmatpush1.msra.mxu0 0.0
        %1074 = vmatprep.subr.mxu0 0.0
        %1075 = vmatpush1.msra.mxu0 0.0
        %1076 = vmatprep.subr.mxu0 0.0
        %1077 = vmatpush1.msra.mxu0 0.0
        %1078 = vmatprep.subr.mxu0 0.0
        %1079 = vmatpush1.msra.mxu0 0.0
        %1080 = vmatprep.subr.mxu0 0.0
        %1081 = vmatpush1.msra.mxu0 0.0
        %1082 = vmatprep.subr.mxu0 0.0
        %1083 = vmatpush1.msra.mxu0 0.0
        %1084 = vmatprep.subr.mxu0 0.0
        %1085 = vmatpush1.msra.mxu0 0.0
        %1086 = vmatprep.subr.mxu0 0.0
        %1087 = vmatpush1.msra.mxu0 0.0
        %1088 = vmatprep.subr.mxu0 0.0
        %1089 = vmatpush1.msra.mxu0 0.0
        %1090 = vmatprep.subr.mxu0 0.0
        %1091 = vmatpush1.msra.mxu0 0.0
        %1092 = vmatprep.mubr.f32.mxu0 0.0
        %1093 = vmatmul.mubr.f32.gmra.mrb[0].mxu0 %v1026
        %v1094 = vpop.f32.mrb[0].mxu0
        %v1095 = vadd.f32 0.0, %v1094
        %v1096 = vpop.f32.mrb[0].mxu0
        %1097 = vdwg.mxu0
        %v1098 = vadd.f32 %v934, %v1095
        %vm1099 = vcmp.ge.s32.totalorder %v612, 24
        %vm1100 = vcmp.lt.s32.totalorder %v612, 32
        %vm1101 = vmand %vm1099, %vm1100
        %v1102 = vsel %vm1101, 1, 0
        %vm1103 = vcmp.eq.s32.totalorder %v1102, 1
        %v1104 = vsel %vm1103, %v607, 0.0
        %v1105 = vsel %vm1103, %v609, 0.0
        %1106 = vmatprep.subr.mxu0 0.0
        %1107 = vmatpush1.xpose.msra.mxu0 %v1104
        %1108 = vmatprep.subr.mxu0 0.0
        %1109 = vmatpush1.xpose.msra.mxu0 0.0
        %1110 = vmatprep.subr.mxu0 0.0
        %1111 = vmatpush1.xpose.msra.mxu0 0.0
        %1112 = vmatprep.subr.mxu0 0.0
        %1113 = vmatpush1.xpose.msra.mxu0 0.0
        %1114 = vmatprep.subr.mxu0 0.0
        %1115 = vmatpush1.xpose.msra.mxu0 0.0
        %1116 = vmatprep.subr.mxu0 0.0
        %1117 = vmatpush1.xpose.msra.mxu0 0.0
        %1118 = vmatprep.subr.mxu0 0.0
        %1119 = vmatpush1.xpose.msra.mxu0 0.0
        %1120 = vmatprep.subr.mxu0 0.0
        %1121 = vmatpush1.xpose.msra.mxu0 0.0
        %1122 = vmatprep.subr.mxu0 0.0
        %1123 = vmatpush1.xpose.msra.mxu0 0.0
        %1124 = vmatprep.subr.mxu0 0.0
        %1125 = vmatpush1.xpose.msra.mxu0 0.0
        %1126 = vmatprep.subr.mxu0 0.0
        %1127 = vmatpush1.xpose.msra.mxu0 0.0
        %1128 = vmatprep.subr.mxu0 0.0
        %1129 = vmatpush1.xpose.msra.mxu0 0.0
        %1130 = vmatprep.subr.mxu0 0.0
        %1131 = vmatpush1.xpose.msra.mxu0 0.0
        %1132 = vmatprep.subr.mxu0 0.0
        %1133 = vmatpush1.xpose.msra.mxu0 0.0
        %1134 = vmatprep.subr.mxu0 0.0
        %1135 = vmatpush1.xpose.msra.mxu0 0.0
        %1136 = vmatprep.subr.mxu0 0.0
        %1137 = vmatpush1.xpose.msra.mxu0 0.0
        %1138 = vmatprep.subr.mxu0 0.0
        %1139 = vmatpush1.xpose.msra.mxu0 0.0
        %1140 = vmatprep.subr.mxu0 0.0
        %1141 = vmatpush1.xpose.msra.mxu0 0.0
        %1142 = vmatprep.subr.mxu0 0.0
        %1143 = vmatpush1.xpose.msra.mxu0 0.0
        %1144 = vmatprep.subr.mxu0 0.0
        %1145 = vmatpush1.xpose.msra.mxu0 0.0
        %1146 = vmatprep.subr.mxu0 0.0
        %1147 = vmatpush1.xpose.msra.mxu0 0.0
        %1148 = vmatprep.subr.mxu0 0.0
        %1149 = vmatpush1.xpose.msra.mxu0 0.0
        %1150 = vmatprep.subr.mxu0 0.0
        %1151 = vmatpush1.xpose.msra.mxu0 0.0
        %1152 = vmatprep.subr.mxu0 0.0
        %1153 = vmatpush1.xpose.msra.mxu0 0.0
        %1154 = vmatprep.subr.mxu0 0.0
        %1155 = vmatpush1.xpose.msra.mxu0 0.0
        %1156 = vmatprep.subr.mxu0 0.0
        %1157 = vmatpush1.xpose.msra.mxu0 0.0
        %1158 = vmatprep.subr.mxu0 0.0
        %1159 = vmatpush1.xpose.msra.mxu0 0.0
        %1160 = vmatprep.subr.mxu0 0.0
        %1161 = vmatpush1.xpose.msra.mxu0 0.0
        %1162 = vmatprep.subr.mxu0 0.0
        %1163 = vmatpush1.xpose.msra.mxu0 0.0
        %1164 = vmatprep.subr.mxu0 0.0
        %1165 = vmatpush1.xpose.msra.mxu0 0.0
        %1166 = vmatprep.subr.mxu0 0.0
        %1167 = vmatpush1.xpose.msra.mxu0 0.0
        %1168 = vmatprep.subr.mxu0 0.0
        %1169 = vmatpush1.xpose.msra.mxu0 0.0
        %1170 = vmatprep.mubr.f32.mxu0 0.0
        %1171 = vmatmul.mubr.f32.gmra.mrb[0].mxu0 %v613
        %v1172 = vpop.f32.mrb[0].mxu0
        %v1173 = vadd.f32 0.0, %v1172
        %v1174 = vpop.f32.mrb[0].mxu0
        %1175 = vdwg.mxu0
        %v1176 = vsel %vm691, %v1173, -inf
        %1177 = vmax.xlane.f32.xlu0 %v1176
        %v1178 = vpop.xlane.xlu0 %1177
        %v1179 = vsub.f32 %v1173, %v1178
        %v1180 = vmul.f32 %v1179, 1.442695
        %v1181 = vpow.pop %v1180
        %v1182 = vsel %vm691, %v1181, 0.0
        %1183 = vadd.xlane.f32.xlu0 %v1182
        %v1184 = vpop.xlane.xlu0 %1183
        %v1185 = vrcp.pop %v1184
        %v1186 = vmul.f32 %v1181, %v1185
        %v1188 = vsel %vm691, %v1186, 0
        %1190 = vmatprep.subr.mxu0 0.0
        %1191 = vmatpush1.msra.mxu0 %v1105
        %1192 = vmatprep.subr.mxu0 0.0
        %1193 = vmatpush1.msra.mxu0 0.0
        %1194 = vmatprep.subr.mxu0 0.0
        %1195 = vmatpush1.msra.mxu0 0.0
        %1196 = vmatprep.subr.mxu0 0.0
        %1197 = vmatpush1.msra.mxu0 0.0
        %1198 = vmatprep.subr.mxu0 0.0
        %1199 = vmatpush1.msra.mxu0 0.0
        %1200 = vmatprep.subr.mxu0 0.0
        %1201 = vmatpush1.msra.mxu0 0.0
        %1202 = vmatprep.subr.mxu0 0.0
        %1203 = vmatpush1.msra.mxu0 0.0
        %1204 = vmatprep.subr.mxu0 0.0
        %1205 = vmatpush1.msra.mxu0 0.0
        %1206 = vmatprep.subr.mxu0 0.0
        %1207 = vmatpush1.msra.mxu0 0.0
        %1208 = vmatprep.subr.mxu0 0.0
        %1209 = vmatpush1.msra.mxu0 0.0
        %1210 = vmatprep.subr.mxu0 0.0
        %1211 = vmatpush1.msra.mxu0 0.0
        %1212 = vmatprep.subr.mxu0 0.0
        %1213 = vmatpush1.msra.mxu0 0.0
        %1214 = vmatprep.subr.mxu0 0.0
        %1215 = vmatpush1.msra.mxu0 0.0
        %1216 = vmatprep.subr.mxu0 0.0
        %1217 = vmatpush1.msra.mxu0 0.0
        %1218 = vmatprep.subr.mxu0 0.0
        %1219 = vmatpush1.msra.mxu0 0.0
        %1220 = vmatprep.subr.mxu0 0.0
        %1221 = vmatpush1.msra.mxu0 0.0
        %1222 = vmatprep.subr.mxu0 0.0
        %1223 = vmatpush1.msra.mxu0 0.0
        %1224 = vmatprep.subr.mxu0 0.0
        %1225 = vmatpush1.msra.mxu0 0.0
        %1226 = vmatprep.subr.mxu0 0.0
        %1227 = vmatpush1.msra.mxu0 0.0
        %1228 = vmatprep.subr.mxu0 0.0
        %1229 = vmatpush1.msra.mxu0 0.0
        %1230 = vmatprep.subr.mxu0 0.0
        %1231 = vmatpush1.msra.mxu0 0.0
        %1232 = vmatprep.subr.mxu0 0.0
        %1233 = vmatpush1.msra.mxu0 0.0
        %1234 = vmatprep.subr.mxu0 0.0
        %1235 = vmatpush1.msra.mxu0 0.0
        %1236 = vmatprep.subr.mxu0 0.0
        %1237 = vmatpush1.msra.mxu0 0.0
        %1238 = vmatprep.subr.mxu0 0.0
        %1239 = vmatpush1.msra.mxu0 0.0
        %1240 = vmatprep.subr.mxu0 0.0
        %1241 = vmatpush1.msra.mxu0 0.0
        %1242 = vmatprep.subr.mxu0 0.0
        %1243 = vmatpush1.msra.mxu0 0.0
        %1244 = vmatprep.subr.mxu0 0.0
        %1245 = vmatpush1.msra.mxu0 0.0
        %1246 = vmatprep.subr.mxu0 0.0
        %1247 = vmatpush1.msra.mxu0 0.0
        %1248 = vmatprep.subr.mxu0 0.0
        %1249 = vmatpush1.msra.mxu0 0.0
        %1250 = vmatprep.subr.mxu0 0.0
        %1251 = vmatpush1.msra.mxu0 0.0
        %1252 = vmatprep.subr.mxu0 0.0
        %1253 = vmatpush1.msra.mxu0 0.0
        %1254 = vmatprep.mubr.f32.mxu0 0.0
        %1255 = vmatmul.mubr.f32.gmra.mrb[0].mxu0 %v1188
        %v1256 = vpop.f32.mrb[0].mxu0
        %v1257 = vadd.f32 0.0, %v1256
        %v1258 = vpop.f32.mrb[0].mxu0
        %1259 = vdwg.mxu0
        %v1260 = vadd.f32 %v1098, %v1257
        %v1261 = vadd.f32 %v493, %v1260
        %v1262 = vld [vmem:[#allocation10] sm:$0xff]
        %v1263 = vld [vmem:[#allocation10 + $0x8] sm:$0xff]
        %v1264 = vld [vmem:[#allocation10 + $0x10] sm:$0xff]
        %v1265 = vld [vmem:[#allocation10 + $0x18] sm:$0xff]
        %v1266 = vld [vmem:[#allocation10 + $0x20] sm:$0xff]
        %v1267 = vld [vmem:[#allocation10 + $0x28] sm:$0xff]
        %v1268 = vld [vmem:[#allocation10 + $0x30] sm:$0xff]
        %v1269 = vld [vmem:[#allocation10 + $0x38] sm:$0xff]
        %v1270 = vld [vmem:[#allocation10 + $0x40] sm:$0xff]
        %v1271 = vld [vmem:[#allocation10 + $0x48] sm:$0xff]
        %v1272 = vld [vmem:[#allocation10 + $0x50] sm:$0xff]
        %v1273 = vld [vmem:[#allocation10 + $0x58] sm:$0xff]
        %v1274 = vld [vmem:[#allocation10 + $0x60] sm:$0xff]
        %v1275 = vld [vmem:[#allocation10 + $0x68] sm:$0xff]
        %v1276 = vld [vmem:[#allocation10 + $0x70] sm:$0xff]
        %v1277 = vld [vmem:[#allocation10 + $0x78] sm:$0xff]
        %v1278 = vld [vmem:[%s7] sm:$0x1]
        %v1280 = vlaneseq
        %v1281 = vshrl.u32 %v1280, 7
        %v1282 = vsub.s32 0, %v1281
        %v1283 = vrot.slane %v1278, %v1282
        %1285 = vmatprep.subr.mxu0 0.0
        %1286 = vmatpush1.msra.mxu0 %v1262
        %1287 = vmatprep.subr.mxu0 0.0
        %1288 = vmatpush1.msra.mxu0 %v1263
        %1289 = vmatprep.subr.mxu0 0.0
        %1290 = vmatpush1.msra.mxu0 %v1264
        %1291 = vmatprep.subr.mxu0 0.0
        %1292 = vmatpush1.msra.mxu0 %v1265
        %1293 = vmatprep.subr.mxu0 0.0
        %1294 = vmatpush1.msra.mxu0 %v1266
        %1295 = vmatprep.subr.mxu0 0.0
        %1296 = vmatpush1.msra.mxu0 %v1267
        %1297 = vmatprep.subr.mxu0 0.0
        %1298 = vmatpush1.msra.mxu0 %v1268
        %1299 = vmatprep.subr.mxu0 0.0
        %1300 = vmatpush1.msra.mxu0 %v1269
        %1301 = vmatprep.subr.mxu0 0.0
        %1302 = vmatpush1.msra.mxu0 %v1270
        %1303 = vmatprep.subr.mxu0 0.0
        %1304 = vmatpush1.msra.mxu0 %v1271
        %1305 = vmatprep.subr.mxu0 0.0
        %1306 = vmatpush1.msra.mxu0 %v1272
        %1307 = vmatprep.subr.mxu0 0.0
        %1308 = vmatpush1.msra.mxu0 %v1273
        %1309 = vmatprep.subr.mxu0 0.0
        %1310 = vmatpush1.msra.mxu0 %v1274
        %1311 = vmatprep.subr.mxu0 0.0
        %1312 = vmatpush1.msra.mxu0 %v1275
        %1313 = vmatprep.subr.mxu0 0.0
        %1314 = vmatpush1.msra.mxu0 %v1276
        %1315 = vmatprep.subr.mxu0 0.0
        %1316 = vmatpush1.msra.mxu0 %v1277
        %1317 = vmatprep.subr.mxu0 0.0
        %1318 = vmatpush1.msra.mxu0 0.0
        %1319 = vmatprep.subr.mxu0 0.0
        %1320 = vmatpush1.msra.mxu0 0.0
        %1321 = vmatprep.subr.mxu0 0.0
        %1322 = vmatpush1.msra.mxu0 0.0
        %1323 = vmatprep.subr.mxu0 0.0
        %1324 = vmatpush1.msra.mxu0 0.0
        %1325 = vmatprep.subr.mxu0 0.0
        %1326 = vmatpush1.msra.mxu0 0.0
        %1327 = vmatprep.subr.mxu0 0.0
        %1328 = vmatpush1.msra.mxu0 0.0
        %1329 = vmatprep.subr.mxu0 0.0
        %1330 = vmatpush1.msra.mxu0 0.0
        %1331 = vmatprep.subr.mxu0 0.0
        %1332 = vmatpush1.msra.mxu0 0.0
        %1333 = vmatprep.subr.mxu0 0.0
        %1334 = vmatpush1.msra.mxu0 0.0
        %1335 = vmatprep.subr.mxu0 0.0
        %1336 = vmatpush1.msra.mxu0 0.0
        %1337 = vmatprep.subr.mxu0 0.0
        %1338 = vmatpush1.msra.mxu0 0.0
        %1339 = vmatprep.subr.mxu0 0.0
        %1340 = vmatpush1.msra.mxu0 0.0
        %1341 = vmatprep.subr.mxu0 0.0
        %1342 = vmatpush1.msra.mxu0 0.0
        %1343 = vmatprep.subr.mxu0 0.0
        %1344 = vmatpush1.msra.mxu0 0.0
        %1345 = vmatprep.subr.mxu0 0.0
        %1346 = vmatpush1.msra.mxu0 0.0
        %1347 = vmatprep.subr.mxu0 0.0
        %1348 = vmatpush1.msra.mxu0 0.0
        %1349 = vmatprep.mubr.f32.mxu0 0.0
        %1350 = vmatmul.mubr.f32.gmra.mrb[0].mxu0 %v1261
        %v1351 = vpop.f32.mrb[0].mxu0
        %v1352 = vadd.f32 %v1283, %v1351
        %v1353 = vpop.f32.mrb[0].mxu0
        %1354 = vdwg.mxu0
        %v1355 = vmax.f32 %v1352, 0.0
        %v1356 = vadd.f32 %v1261, %v1355
        %1357 = vst [vmem:[%s400] sm:$0xff] %v1356
        %s1358 = sand.u32 %s215, 1
        %s1359 = scalar_lea.sflag [#allocation4], %s1358
        %s1360 = sand.u32 %s215, 1
        %s1361 = smul.addr %s1360, 8
        %s1362 = scalar_lea.vmem [#allocation11], %s1361
        // Predicated region
        $region73: #{tpu_custom_call.1} parent=51 // pred_check
          %p1363 = pneg %p225
        $region74: #{tpu_custom_call.1} parent=51 // pred_check_branch
          %1365 = sbr.rel (%p1363) target = $region76
        $region75: #{tpu_custom_call.1} parent=51 // pred_region
          %s1367 = ssub.s32 128, 128
          %1368 = vsyncadd %s1359, %s1367
          %s1369 = smul.addr %s29, 128
          %s1370 = scalar_lea.hbm %s8, %s1369
          %s1372 = sshll.u32 %s1362, 4
          %s1373 = int_to_ptr.vmem [resolvable:$true] %s1372
          %1375 = dma.vmem_to_hbm [thread:$0]  %s1373, 128, %s1370, %s1359
        $region76: #{tpu_custom_call.1} parent=51 // pred_fallthru
          _
      $region52: #{tpu_custom_call.1} parent=5 // pred_fallthru
        _
      %p1376 = scmp.le.s32.totalorder 2, %s24
      // Predicated region
      $region77: #{tpu_custom_call.1} parent=5 // pred_check
        %p1377 = pneg %p1376
      $region78: #{tpu_custom_call.1} parent=5 // pred_check_branch
        %1379 = sbr.rel (%p1377) target = $region80
      $region79: #{tpu_custom_call.1} parent=5 // pred_region
        %s1380 = ssub.s32 %s24, 2
        // Predicated region
        $region81: #{tpu_custom_call.1} parent=79 // pred_check
          %p1381 = pneg %p231
        $region82: #{tpu_custom_call.1} parent=79 // pred_check_branch
          %1383 = sbr.rel (%p1381) target = $region84
        $region83: #{tpu_custom_call.1} parent=79 // pred_region
          %s1384 = sand.u32 %s216, 1
          %s1385 = scalar_lea.sflag [#allocation4], %s1384
          %s1386 = sand.u32 %s216, 1
          %s1387 = smul.addr %s1386, 8
          %s1388 = scalar_lea.vmem [#allocation11], %s1387
          %1389 = dma.done %s1385, 128
        $region84: #{tpu_custom_call.1} parent=79 // pred_fallthru
          _
      $region80: #{tpu_custom_call.1} parent=5 // pred_fallthru
        _
    $region6: #{tpu_custom_call.1} parent=1 // loop_footer
      %s28 = sadd.s32 1, %s24
    $region7: #{tpu_custom_call.1} parent=1 // loop_footer_branch
      %23 = sbr.rel target = $region3
    $region8: #{tpu_custom_call.1} parent=1 // loop_exit
      _
    %1390 = vsyncpa [#allocation3], 1
    %s1391 = scalar_lea.sflag [#allocation3], 1
    %1392 = vsyncpa %s1391, 1
    %1393 = vsyncpa [#allocation6], 1
    %s1394 = scalar_lea.sflag [#allocation6], 1
    %1395 = vsyncpa %s1394, 1
    %1396 = vsyncpa [#allocation9], 1
    %1397 = vsyncpa [#allocation4], 1
    %s1398 = scalar_lea.sflag [#allocation4], 1
    %1399 = vsyncpa %s1398, 1

</llo_original>
